<compile_context>
chip_gen: v6e
topology: v6e:2x2x1
jax: 0.10.0
libtpu: 0.0.40
codegen_flags: <defaults>
</compile_context>

<pallas_src>
import jax
import jax.numpy as jnp
from jax import lax
from jax.experimental import pallas as pl
from jax.experimental.pallas import tpu as pltpu


def drqn_rollout_kernel(x_ref, h0_ref,
                        w_in_ref, b_in_ref,
                        w_ih_ref, b_ih_ref,
                        w_hh_ref, b_hh_ref,
                        w_out_ref, b_out_ref,
                        q_ref, h1_ref,
                        gi_ref, h_all_ref):
    """Full T-step GRU rollout in one kernel invocation (no grid)."""
    T, B, D = x_ref.shape
    H = h0_ref.shape[-1]
    A = q_ref.shape[-1]

    # ---- Hoisted, time-batched x-only path (two big MXU passes, M = T*B) ----
    x_flat = x_ref[...].astype(jnp.float32).reshape(T * B, D)
    out1 = jnp.maximum(
        jnp.dot(x_flat, w_in_ref[...], preferred_element_type=jnp.float32)
        + b_in_ref[...], 0.0)                                        # [T*B, H]
    gi_all = (jnp.dot(out1, w_ih_ref[...], preferred_element_type=jnp.float32)
              + b_ih_ref[...])                                       # [T*B, 3H]
    gi_ref[...] = gi_all.reshape(T, B, 3 * H)

    # Weights used inside the recurrence (VMEM-resident, loaded once).
    w_hh = w_hh_ref[...]                                             # [H, 3H]
    b_hh = b_hh_ref[...]                                             # [1, 3H]
    h0 = h0_ref[...].astype(jnp.float32)                             # [B, H]

    # ---- Recurrence: only gh + gates per step (f32 gate math everywhere) ----
    def step(t, h):
        gi = gi_ref[t]                                               # [B, 3H]
        gh = jnp.dot(h, w_hh, preferred_element_type=jnp.float32) + b_hh
        r = jax.nn.sigmoid(gi[:, 0 * H:1 * H] + gh[:, 0 * H:1 * H])
        z = jax.nn.sigmoid(gi[:, 1 * H:2 * H] + gh[:, 1 * H:2 * H])
        n = jnp.tanh(gi[:, 2 * H:3 * H] + r * gh[:, 2 * H:3 * H])
        h_new = (1.0 - z) * n + z * h
        h_all_ref[t] = h_new                                         # VMEM store
        return h_new

    h_last = lax.fori_loop(0, T, step, h0, unroll=True)

    # ---- Deferred linear_out: one batched matmul + one writeback ----
    h_flat = h_all_ref[...].reshape(T * B, H)
    q = jnp.dot(h_flat, w_out_ref[...],
                preferred_element_type=jnp.float32) + b_out_ref[...]  # [T*B, A]
    q_ref[...] = q.reshape(T, B, A).astype(q_ref.dtype)
    h1_ref[...] = h_last.astype(h1_ref.dtype)


@jax.jit
def mlp_drqn_rollout(x_seq, h0, params):
    """x_seq: [T, B, D], h0: [B, H] -> (q: [T, B, A], h_T: [B, H])."""
    T, B, D = x_seq.shape
    H = h0.shape[-1]
    A = params["w_out_t"].shape[-1]

    vmem_full = pl.BlockSpec(memory_space=pltpu.MemorySpace.VMEM)

    return pl.pallas_call(
        drqn_rollout_kernel,
        out_shape=(jax.ShapeDtypeStruct((T, B, A), jnp.float32),
                   jax.ShapeDtypeStruct((B, H), jnp.float32)),
        in_specs=[vmem_full] * 10,
        out_specs=(vmem_full, vmem_full),
        scratch_shapes=[
            pltpu.VMEM((T, B, 3 * H), jnp.float32),   # gi for all timesteps
            pltpu.VMEM((T, B, H), jnp.float32),       # h_t for all timesteps
        ],
        # TODO(synk): for long sequences where x_seq/gi exceed VMEM, switch to a
        # grid over time-blocks (carry h via scratch) instead of one resident slab.
    )(x_seq, h0,
      params["w_in_t"], params["b_in"],
      params["w_ih_t"], params["b_ih"],
      params["w_hh_t"], params["b_hh"],
      params["w_out_t"], params["b_out"])


def mlp_drqn_forward(x, h0, params):
    """Module-equivalent single step: x: [B, D] -> (q: [B, A], h1: [B, H])."""
    q_seq, h1 = mlp_drqn_rollout(x[None], h0, params)
    return q_seq[0], h1


def init_params(key, input_dim, hidden, num_actions):
    """Deterministic synthetic params, PyTorch-style uniform(-1/sqrt(fan_in), 1/sqrt(fan_in))."""
    ks = jax.random.split(key, 8)

    def u(k, shape, fan_in):
        bound = 1.0 / jnp.sqrt(jnp.float32(fan_in))
        return jax.random.uniform(k, shape, jnp.float32, -bound, bound)

    return {
        # stored already transposed: [in, out]
        "w_in_t":  u(ks[0], (input_dim, hidden), input_dim),
        "b_in":    u(ks[1], (1, hidden), input_dim),
        "w_ih_t":  u(ks[2], (hidden, 3 * hidden), hidden),
        "b_ih":    u(ks[3], (1, 3 * hidden), hidden),
        "w_hh_t":  u(ks[4], (hidden, 3 * hidden), hidden),
        "b_hh":    u(ks[5], (1, 3 * hidden), hidden),
        "w_out_t": u(ks[6], (hidden, num_actions), hidden),
        "b_out":   u(ks[7], (1, num_actions), hidden),
    }


def reference_step(x, h, p):
    """Pure-JAX reference for one PyTorch MLP_DRQN.forward step."""
    H = h.shape[-1]
    out1 = jnp.maximum(x @ p["w_in_t"] + p["b_in"], 0.0)
    gi = out1 @ p["w_ih_t"] + p["b_ih"]
    gh = h @ p["w_hh_t"] + p["b_hh"]
    r = jax.nn.sigmoid(gi[:, :H] + gh[:, :H])
    z = jax.nn.sigmoid(gi[:, H:2 * H] + gh[:, H:2 * H])
    n = jnp.tanh(gi[:, 2 * H:] + r * gh[:, 2 * H:])
    h1 = (1.0 - z) * n + z * h
    q = h1 @ p["w_out_t"] + p["b_out"]
    return q, h1


def reference_rollout(x_seq, h0, p):
    h = h0
    qs = []
    for t in range(x_seq.shape[0]):
        q, h = reference_step(x_seq[t], h, p)
        qs.append(q)
    return jnp.stack(qs, axis=0), h


if __name__ == "__main__":
    T, B, INPUT_DIM, HIDDEN, NUM_ACTIONS = 8, 2, 16, 32, 8

    key = jax.random.PRNGKey(0)
    k_x, k_p = jax.random.split(key)

    x_seq = jax.random.normal(k_x, (T, B, INPUT_DIM), jnp.float32)
    h0 = jnp.zeros((B, HIDDEN), jnp.float32)          # init_hidden -> zeros
    params = init_params(k_p, INPUT_DIM, HIDDEN, NUM_ACTIONS)

    # Pure-JAX references.
    q_ref_seq, h_ref = reference_rollout(x_seq, h0, params)
    q1_ref, h1_ref = reference_step(x_seq[0], h0, params)

    # Full T-step rollout in one kernel launch.
    q_seq, h_T = mlp_drqn_rollout(x_seq, h0, params)
    jax.block_until_ready((q_seq, h_T))
    assert jnp.allclose(q_seq, q_ref_seq, atol=1e-4, rtol=1e-4)
    assert jnp.allclose(h_T, h_ref, atol=1e-4, rtol=1e-4)

    # Single-step path (== the PyTorch module's forward(x)).
    q1, h1 = mlp_drqn_forward(x_seq[0], h0, params)
    jax.block_until_ready((q1, h1))
    assert jnp.allclose(q1, q1_ref, atol=1e-4, rtol=1e-4)
    assert jnp.allclose(h1, h1_ref, atol=1e-4, rtol=1e-4)

    print("KERNEL_OK")
</pallas_src>

<mosaic_0001>
module attributes {stable_mosaic.version = 11 : i64} {
  func.func @drqn_rollout_kernel(%arg0: memref<8x2x16xf32, #tpu.memory_space<vmem>>, %arg1: memref<2x32xf32, #tpu.memory_space<vmem>>, %arg2: memref<16x32xf32, #tpu.memory_space<vmem>>, %arg3: memref<1x32xf32, #tpu.memory_space<vmem>>, %arg4: memref<32x96xf32, #tpu.memory_space<vmem>>, %arg5: memref<1x96xf32, #tpu.memory_space<vmem>>, %arg6: memref<32x96xf32, #tpu.memory_space<vmem>>, %arg7: memref<1x96xf32, #tpu.memory_space<vmem>>, %arg8: memref<32x8xf32, #tpu.memory_space<vmem>>, %arg9: memref<1x8xf32, #tpu.memory_space<vmem>>, %arg10: memref<8x2x8xf32, #tpu.memory_space<vmem>>, %arg11: memref<2x32xf32, #tpu.memory_space<vmem>>, %arg12: memref<8x2x96xf32, #tpu.memory_space<vmem>>, %arg13: memref<8x2x32xf32, #tpu.memory_space<vmem>>) attributes {dimension_semantics = [], scalar_prefetch = 0 : i64, scratch_operands = 2 : i64, tpu.core_type = #tpu.core_type<tc>} {
    %c0 = arith.constant 0 : index
    %c0_0 = arith.constant 0 : index
    %c0_1 = arith.constant 0 : index
    %0 = vector.load %arg0[%c0, %c0_0, %c0_1] : memref<8x2x16xf32, #tpu.memory_space<vmem>>, vector<8x2x16xf32>
    %1 = vector.shape_cast %0 : vector<8x2x16xf32> to vector<16x16xf32>
    %c0_2 = arith.constant 0 : index
    %c0_3 = arith.constant 0 : index
    %2 = vector.load %arg2[%c0_2, %c0_3] : memref<16x32xf32, #tpu.memory_space<vmem>>, vector<16x32xf32>
    %cst = arith.constant dense<0.000000e+00> : vector<16x32xf32>
    %3 = tpu.matmul %1, %2, %cst {dimension_numbers = #tpu.dot_dimension_numbers<[1], [0], [0], [1], [0, 0, 1, 1], [], []>} : vector<16x16xf32>, vector<16x32xf32>, vector<16x32xf32> -> vector<16x32xf32>
    %c0_4 = arith.constant 0 : index
    %c0_5 = arith.constant 0 : index
    %4 = vector.load %arg3[%c0_4, %c0_5] : memref<1x32xf32, #tpu.memory_space<vmem>>, vector<1x32xf32>
    %5 = vector.broadcast %4 : vector<1x32xf32> to vector<16x32xf32>
    %6 = arith.addf %3, %5 : vector<16x32xf32>
    %cst_6 = arith.constant 0.000000e+00 : f32
    %7 = vector.broadcast %cst_6 : f32 to vector<16x32xf32>
    %8 = arith.maximumf %6, %7 : vector<16x32xf32>
    %c0_7 = arith.constant 0 : index
    %c0_8 = arith.constant 0 : index
    %9 = vector.load %arg4[%c0_7, %c0_8] : memref<32x96xf32, #tpu.memory_space<vmem>>, vector<32x96xf32>
    %cst_9 = arith.constant dense<0.000000e+00> : vector<16x96xf32>
    %10 = tpu.matmul %8, %9, %cst_9 {dimension_numbers = #tpu.dot_dimension_numbers<[1], [0], [0], [1], [0, 0, 1, 1], [], []>} : vector<16x32xf32>, vector<32x96xf32>, vector<16x96xf32> -> vector<16x96xf32>
    %c0_10 = arith.constant 0 : index
    %c0_11 = arith.constant 0 : index
    %11 = vector.load %arg5[%c0_10, %c0_11] : memref<1x96xf32, #tpu.memory_space<vmem>>, vector<1x96xf32>
    %12 = vector.broadcast %11 : vector<1x96xf32> to vector<16x96xf32>
    %13 = arith.addf %10, %12 : vector<16x96xf32>
    %14 = vector.shape_cast %13 : vector<16x96xf32> to vector<8x2x96xf32>
    %c0_12 = arith.constant 0 : index
    %c0_13 = arith.constant 0 : index
    %c0_14 = arith.constant 0 : index
    %15 = vector.load %arg12[%c0_12, %c0_13, %c0_14] : memref<8x2x96xf32, #tpu.memory_space<vmem>>, vector<8x2x96xf32>
    tpu.vector_store %arg12[%c0_12, %c0_13, %c0_14], %14 {strides = array<i32>} : memref<8x2x96xf32, #tpu.memory_space<vmem>>, vector<8x2x96xf32>,
    %c0_15 = arith.constant 0 : index
    %c0_16 = arith.constant 0 : index
    %16 = vector.load %arg6[%c0_15, %c0_16] : memref<32x96xf32, #tpu.memory_space<vmem>>, vector<32x96xf32>
    %c0_17 = arith.constant 0 : index
    %c0_18 = arith.constant 0 : index
    %17 = vector.load %arg7[%c0_17, %c0_18] : memref<1x96xf32, #tpu.memory_space<vmem>>, vector<1x96xf32>
    %c0_19 = arith.constant 0 : index
    %c0_20 = arith.constant 0 : index
    %18 = vector.load %arg1[%c0_19, %c0_20] : memref<2x32xf32, #tpu.memory_space<vmem>>, vector<2x32xf32>
    %c0_i32 = arith.constant 0 : i32
    %19 = arith.index_cast %c0_i32 : i32 to index
    %c0_21 = arith.constant 0 : index
    %c0_22 = arith.constant 0 : index
    %20 = vector.load %arg12[%19, %c0_21, %c0_22] : memref<8x2x96xf32, #tpu.memory_space<vmem>>, vector<1x2x96xf32>
    %21 = vector.shape_cast %20 : vector<1x2x96xf32> to vector<2x96xf32>
    %cst_23 = arith.constant dense<0.000000e+00> : vector<2x96xf32>
    %22 = tpu.matmul %18, %16, %cst_23 {dimension_numbers = #tpu.dot_dimension_numbers<[1], [0], [0], [1], [0, 0, 1, 1], [], []>} : vector<2x32xf32>, vector<32x96xf32>, vector<2x96xf32> -> vector<2x96xf32>
    %23 = vector.broadcast %17 : vector<1x96xf32> to vector<2x96xf32>
    %24 = arith.addf %22, %23 : vector<2x96xf32>
    %25 = vector.extract_strided_slice %21 {offsets = [0, 0], sizes = [2, 32], strides = [1, 1]} : vector<2x96xf32> to vector<2x32xf32>
    %26 = vector.extract_strided_slice %24 {offsets = [0, 0], sizes = [2, 32], strides = [1, 1]} : vector<2x96xf32> to vector<2x32xf32>
    %27 = arith.addf %25, %26 : vector<2x32xf32>
    %28 = arith.negf %27 : vector<2x32xf32>
    %29 = math.exp %28 : vector<2x32xf32>
    %cst_24 = arith.constant 1.000000e+00 : f32
    %30 = vector.broadcast %cst_24 : f32 to vector<2x32xf32>
    %31 = arith.addf %30, %29 : vector<2x32xf32>
    %32 = arith.divf %30, %31 : vector<2x32xf32>
    %33 = vector.extract_strided_slice %21 {offsets = [0, 32], sizes = [2, 32], strides = [1, 1]} : vector<2x96xf32> to vector<2x32xf32>
    %34 = vector.extract_strided_slice %24 {offsets = [0, 32], sizes = [2, 32], strides = [1, 1]} : vector<2x96xf32> to vector<2x32xf32>
    %35 = arith.addf %33, %34 : vector<2x32xf32>
    %36 = arith.negf %35 : vector<2x32xf32>
    %37 = math.exp %36 : vector<2x32xf32>
    %cst_25 = arith.constant 1.000000e+00 : f32
    %38 = vector.broadcast %cst_25 : f32 to vector<2x32xf32>
    %39 = arith.addf %38, %37 : vector<2x32xf32>
    %40 = arith.divf %38, %39 : vector<2x32xf32>
    %41 = vector.extract_strided_slice %21 {offsets = [0, 64], sizes = [2, 32], strides = [1, 1]} : vector<2x96xf32> to vector<2x32xf32>
    %42 = vector.extract_strided_slice %24 {offsets = [0, 64], sizes = [2, 32], strides = [1, 1]} : vector<2x96xf32> to vector<2x32xf32>
    %43 = arith.mulf %32, %42 : vector<2x32xf32>
    %44 = arith.addf %41, %43 : vector<2x32xf32>
    %45 = math.tanh %44 : vector<2x32xf32>
    %cst_26 = arith.constant 1.000000e+00 : f32
    %46 = vector.broadcast %cst_26 : f32 to vector<2x32xf32>
    %47 = arith.subf %46, %40 : vector<2x32xf32>
    %48 = arith.mulf %47, %45 : vector<2x32xf32>
    %49 = arith.mulf %40, %18 : vector<2x32xf32>
    %50 = arith.addf %48, %49 : vector<2x32xf32>
    %51 = arith.index_cast %c0_i32 : i32 to index
    %c0_27 = arith.constant 0 : index
    %c0_28 = arith.constant 0 : index
    %52 = vector.load %arg13[%51, %c0_27, %c0_28] : memref<8x2x32xf32, #tpu.memory_space<vmem>>, vector<1x2x32xf32>
    %53 = vector.shape_cast %52 : vector<1x2x32xf32> to vector<2x32xf32>
    %54 = vector.shape_cast %50 : vector<2x32xf32> to vector<1x2x32xf32>
    tpu.vector_store %arg13[%51, %c0_27, %c0_28], %54 {strides = array<i32>} : memref<8x2x32xf32, #tpu.memory_space<vmem>>, vector<1x2x32xf32>,
    %c1_i32 = arith.constant 1 : i32
    %55 = arith.index_cast %c1_i32 : i32 to index
    %c0_29 = arith.constant 0 : index
    %c0_30 = arith.constant 0 : index
    %56 = vector.load %arg12[%55, %c0_29, %c0_30] : memref<8x2x96xf32, #tpu.memory_space<vmem>>, vector<1x2x96xf32>
    %57 = vector.shape_cast %56 : vector<1x2x96xf32> to vector<2x96xf32>
    %cst_31 = arith.constant dense<0.000000e+00> : vector<2x96xf32>
    %58 = tpu.matmul %50, %16, %cst_31 {dimension_numbers = #tpu.dot_dimension_numbers<[1], [0], [0], [1], [0, 0, 1, 1], [], []>} : vector<2x32xf32>, vector<32x96xf32>, vector<2x96xf32> -> vector<2x96xf32>
    %59 = vector.broadcast %17 : vector<1x96xf32> to vector<2x96xf32>
    %60 = arith.addf %58, %59 : vector<2x96xf32>
    %61 = vector.extract_strided_slice %57 {offsets = [0, 0], sizes = [2, 32], strides = [1, 1]} : vector<2x96xf32> to vector<2x32xf32>
    %62 = vector.extract_strided_slice %60 {offsets = [0, 0], sizes = [2, 32], strides = [1, 1]} : vector<2x96xf32> to vector<2x32xf32>
    %63 = arith.addf %61, %62 : vector<2x32xf32>
    %64 = arith.negf %63 : vector<2x32xf32>
    %65 = math.exp %64 : vector<2x32xf32>
    %cst_32 = arith.constant 1.000000e+00 : f32
    %66 = vector.broadcast %cst_32 : f32 to vector<2x32xf32>
    %67 = arith.addf %66, %65 : vector<2x32xf32>
    %68 = arith.divf %66, %67 : vector<2x32xf32>
    %69 = vector.extract_strided_slice %57 {offsets = [0, 32], sizes = [2, 32], strides = [1, 1]} : vector<2x96xf32> to vector<2x32xf32>
    %70 = vector.extract_strided_slice %60 {offsets = [0, 32], sizes = [2, 32], strides = [1, 1]} : vector<2x96xf32> to vector<2x32xf32>
    %71 = arith.addf %69, %70 : vector<2x32xf32>
    %72 = arith.negf %71 : vector<2x32xf32>
    %73 = math.exp %72 : vector<2x32xf32>
    %cst_33 = arith.constant 1.000000e+00 : f32
    %74 = vector.broadcast %cst_33 : f32 to vector<2x32xf32>
    %75 = arith.addf %74, %73 : vector<2x32xf32>
    %76 = arith.divf %74, %75 : vector<2x32xf32>
    %77 = vector.extract_strided_slice %57 {offsets = [0, 64], sizes = [2, 32], strides = [1, 1]} : vector<2x96xf32> to vector<2x32xf32>
    %78 = vector.extract_strided_slice %60 {offsets = [0, 64], sizes = [2, 32], strides = [1, 1]} : vector<2x96xf32> to vector<2x32xf32>
    %79 = arith.mulf %68, %78 : vector<2x32xf32>
    %80 = arith.addf %77, %79 : vector<2x32xf32>
    %81 = math.tanh %80 : vector<2x32xf32>
    %cst_34 = arith.constant 1.000000e+00 : f32
    %82 = vector.broadcast %cst_34 : f32 to vector<2x32xf32>
    %83 = arith.subf %82, %76 : vector<2x32xf32>
    %84 = arith.mulf %83, %81 : vector<2x32xf32>
    %85 = arith.mulf %76, %50 : vector<2x32xf32>
    %86 = arith.addf %84, %85 : vector<2x32xf32>
    %87 = arith.index_cast %c1_i32 : i32 to index
    %c0_35 = arith.constant 0 : index
    %c0_36 = arith.constant 0 : index
    %88 = vector.load %arg13[%87, %c0_35, %c0_36] : memref<8x2x32xf32, #tpu.memory_space<vmem>>, vector<1x2x32xf32>
    %89 = vector.shape_cast %88 : vector<1x2x32xf32> to vector<2x32xf32>
    %90 = vector.shape_cast %86 : vector<2x32xf32> to vector<1x2x32xf32>
    tpu.vector_store %arg13[%87, %c0_35, %c0_36], %90 {strides = array<i32>} : memref<8x2x32xf32, #tpu.memory_space<vmem>>, vector<1x2x32xf32>,
    %c2_i32 = arith.constant 2 : i32
    %91 = arith.index_cast %c2_i32 : i32 to index
    %c0_37 = arith.constant 0 : index
    %c0_38 = arith.constant 0 : index
    %92 = vector.load %arg12[%91, %c0_37, %c0_38] : memref<8x2x96xf32, #tpu.memory_space<vmem>>, vector<1x2x96xf32>
    %93 = vector.shape_cast %92 : vector<1x2x96xf32> to vector<2x96xf32>
    %cst_39 = arith.constant dense<0.000000e+00> : vector<2x96xf32>
    %94 = tpu.matmul %86, %16, %cst_39 {dimension_numbers = #tpu.dot_dimension_numbers<[1], [0], [0], [1], [0, 0, 1, 1], [], []>} : vector<2x32xf32>, vector<32x96xf32>, vector<2x96xf32> -> vector<2x96xf32>
    %95 = vector.broadcast %17 : vector<1x96xf32> to vector<2x96xf32>
    %96 = arith.addf %94, %95 : vector<2x96xf32>
    %97 = vector.extract_strided_slice %93 {offsets = [0, 0], sizes = [2, 32], strides = [1, 1]} : vector<2x96xf32> to vector<2x32xf32>
    %98 = vector.extract_strided_slice %96 {offsets = [0, 0], sizes = [2, 32], strides = [1, 1]} : vector<2x96xf32> to vector<2x32xf32>
    %99 = arith.addf %97, %98 : vector<2x32xf32>
    %100 = arith.negf %99 : vector<2x32xf32>
    %101 = math.exp %100 : vector<2x32xf32>
    %cst_40 = arith.constant 1.000000e+00 : f32
    %102 = vector.broadcast %cst_40 : f32 to vector<2x32xf32>
    %103 = arith.addf %102, %101 : vector<2x32xf32>
    %104 = arith.divf %102, %103 : vector<2x32xf32>
    %105 = vector.extract_strided_slice %93 {offsets = [0, 32], sizes = [2, 32], strides = [1, 1]} : vector<2x96xf32> to vector<2x32xf32>
    %106 = vector.extract_strided_slice %96 {offsets = [0, 32], sizes = [2, 32], strides = [1, 1]} : vector<2x96xf32> to vector<2x32xf32>
    %107 = arith.addf %105, %106 : vector<2x32xf32>
    %108 = arith.negf %107 : vector<2x32xf32>
    %109 = math.exp %108 : vector<2x32xf32>
    %cst_41 = arith.constant 1.000000e+00 : f32
    %110 = vector.broadcast %cst_41 : f32 to vector<2x32xf32>
    %111 = arith.addf %110, %109 : vector<2x32xf32>
    %112 = arith.divf %110, %111 : vector<2x32xf32>
    %113 = vector.extract_strided_slice %93 {offsets = [0, 64], sizes = [2, 32], strides = [1, 1]} : vector<2x96xf32> to vector<2x32xf32>
    %114 = vector.extract_strided_slice %96 {offsets = [0, 64], sizes = [2, 32], strides = [1, 1]} : vector<2x96xf32> to vector<2x32xf32>
    %115 = arith.mulf %104, %114 : vector<2x32xf32>
    %116 = arith.addf %113, %115 : vector<2x32xf32>
    %117 = math.tanh %116 : vector<2x32xf32>
    %cst_42 = arith.constant 1.000000e+00 : f32
    %118 = vector.broadcast %cst_42 : f32 to vector<2x32xf32>
    %119 = arith.subf %118, %112 : vector<2x32xf32>
    %120 = arith.mulf %119, %117 : vector<2x32xf32>
    %121 = arith.mulf %112, %86 : vector<2x32xf32>
    %122 = arith.addf %120, %121 : vector<2x32xf32>
    %123 = arith.index_cast %c2_i32 : i32 to index
    %c0_43 = arith.constant 0 : index
    %c0_44 = arith.constant 0 : index
    %124 = vector.load %arg13[%123, %c0_43, %c0_44] : memref<8x2x32xf32, #tpu.memory_space<vmem>>, vector<1x2x32xf32>
    %125 = vector.shape_cast %124 : vector<1x2x32xf32> to vector<2x32xf32>
    %126 = vector.shape_cast %122 : vector<2x32xf32> to vector<1x2x32xf32>
    tpu.vector_store %arg13[%123, %c0_43, %c0_44], %126 {strides = array<i32>} : memref<8x2x32xf32, #tpu.memory_space<vmem>>, vector<1x2x32xf32>,
    %c3_i32 = arith.constant 3 : i32
    %127 = arith.index_cast %c3_i32 : i32 to index
    %c0_45 = arith.constant 0 : index
    %c0_46 = arith.constant 0 : index
    %128 = vector.load %arg12[%127, %c0_45, %c0_46] : memref<8x2x96xf32, #tpu.memory_space<vmem>>, vector<1x2x96xf32>
    %129 = vector.shape_cast %128 : vector<1x2x96xf32> to vector<2x96xf32>
    %cst_47 = arith.constant dense<0.000000e+00> : vector<2x96xf32>
    %130 = tpu.matmul %122, %16, %cst_47 {dimension_numbers = #tpu.dot_dimension_numbers<[1], [0], [0], [1], [0, 0, 1, 1], [], []>} : vector<2x32xf32>, vector<32x96xf32>, vector<2x96xf32> -> vector<2x96xf32>
    %131 = vector.broadcast %17 : vector<1x96xf32> to vector<2x96xf32>
    %132 = arith.addf %130, %131 : vector<2x96xf32>
    %133 = vector.extract_strided_slice %129 {offsets = [0, 0], sizes = [2, 32], strides = [1, 1]} : vector<2x96xf32> to vector<2x32xf32>
    %134 = vector.extract_strided_slice %132 {offsets = [0, 0], sizes = [2, 32], strides = [1, 1]} : vector<2x96xf32> to vector<2x32xf32>
    %135 = arith.addf %133, %134 : vector<2x32xf32>
    %136 = arith.negf %135 : vector<2x32xf32>
    %137 = math.exp %136 : vector<2x32xf32>
    %cst_48 = arith.constant 1.000000e+00 : f32
    %138 = vector.broadcast %cst_48 : f32 to vector<2x32xf32>
    %139 = arith.addf %138, %137 : vector<2x32xf32>
    %140 = arith.divf %138, %139 : vector<2x32xf32>
    %141 = vector.extract_strided_slice %129 {offsets = [0, 32], sizes = [2, 32], strides = [1, 1]} : vector<2x96xf32> to vector<2x32xf32>
    %142 = vector.extract_strided_slice %132 {offsets = [0, 32], sizes = [2, 32], strides = [1, 1]} : vector<2x96xf32> to vector<2x32xf32>
    %143 = arith.addf %141, %142 : vector<2x32xf32>
    %144 = arith.negf %143 : vector<2x32xf32>
    %145 = math.exp %144 : vector<2x32xf32>
    %cst_49 = arith.constant 1.000000e+00 : f32
    %146 = vector.broadcast %cst_49 : f32 to vector<2x32xf32>
    %147 = arith.addf %146, %145 : vector<2x32xf32>
    %148 = arith.divf %146, %147 : vector<2x32xf32>
    %149 = vector.extract_strided_slice %129 {offsets = [0, 64], sizes = [2, 32], strides = [1, 1]} : vector<2x96xf32> to vector<2x32xf32>
    %150 = vector.extract_strided_slice %132 {offsets = [0, 64], sizes = [2, 32], strides = [1, 1]} : vector<2x96xf32> to vector<2x32xf32>
    %151 = arith.mulf %140, %150 : vector<2x32xf32>
    %152 = arith.addf %149, %151 : vector<2x32xf32>
    %153 = math.tanh %152 : vector<2x32xf32>
    %cst_50 = arith.constant 1.000000e+00 : f32
    %154 = vector.broadcast %cst_50 : f32 to vector<2x32xf32>
    %155 = arith.subf %154, %148 : vector<2x32xf32>
    %156 = arith.mulf %155, %153 : vector<2x32xf32>
    %157 = arith.mulf %148, %122 : vector<2x32xf32>
    %158 = arith.addf %156, %157 : vector<2x32xf32>
    %159 = arith.index_cast %c3_i32 : i32 to index
    %c0_51 = arith.constant 0 : index
    %c0_52 = arith.constant 0 : index
    %160 = vector.load %arg13[%159, %c0_51, %c0_52] : memref<8x2x32xf32, #tpu.memory_space<vmem>>, vector<1x2x32xf32>
    %161 = vector.shape_cast %160 : vector<1x2x32xf32> to vector<2x32xf32>
    %162 = vector.shape_cast %158 : vector<2x32xf32> to vector<1x2x32xf32>
    tpu.vector_store %arg13[%159, %c0_51, %c0_52], %162 {strides = array<i32>} : memref<8x2x32xf32, #tpu.memory_space<vmem>>, vector<1x2x32xf32>,
    %c4_i32 = arith.constant 4 : i32
    %163 = arith.index_cast %c4_i32 : i32 to index
    %c0_53 = arith.constant 0 : index
    %c0_54 = arith.constant 0 : index
    %164 = vector.load %arg12[%163, %c0_53, %c0_54] : memref<8x2x96xf32, #tpu.memory_space<vmem>>, vector<1x2x96xf32>
    %165 = vector.shape_cast %164 : vector<1x2x96xf32> to vector<2x96xf32>
    %cst_55 = arith.constant dense<0.000000e+00> : vector<2x96xf32>
    %166 = tpu.matmul %158, %16, %cst_55 {dimension_numbers = #tpu.dot_dimension_numbers<[1], [0], [0], [1], [0, 0, 1, 1], [], []>} : vector<2x32xf32>, vector<32x96xf32>, vector<2x96xf32> -> vector<2x96xf32>
    %167 = vector.broadcast %17 : vector<1x96xf32> to vector<2x96xf32>
    %168 = arith.addf %166, %167 : vector<2x96xf32>
    %169 = vector.extract_strided_slice %165 {offsets = [0, 0], sizes = [2, 32], strides = [1, 1]} : vector<2x96xf32> to vector<2x32xf32>
    %170 = vector.extract_strided_slice %168 {offsets = [0, 0], sizes = [2, 32], strides = [1, 1]} : vector<2x96xf32> to vector<2x32xf32>
    %171 = arith.addf %169, %170 : vector<2x32xf32>
    %172 = arith.negf %171 : vector<2x32xf32>
    %173 = math.exp %172 : vector<2x32xf32>
    %cst_56 = arith.constant 1.000000e+00 : f32
    %174 = vector.broadcast %cst_56 : f32 to vector<2x32xf32>
    %175 = arith.addf %174, %173 : vector<2x32xf32>
    %176 = arith.divf %174, %175 : vector<2x32xf32>
    %177 = vector.extract_strided_slice %165 {offsets = [0, 32], sizes = [2, 32], strides = [1, 1]} : vector<2x96xf32> to vector<2x32xf32>
    %178 = vector.extract_strided_slice %168 {offsets = [0, 32], sizes = [2, 32], strides = [1, 1]} : vector<2x96xf32> to vector<2x32xf32>
    %179 = arith.addf %177, %178 : vector<2x32xf32>
    %180 = arith.negf %179 : vector<2x32xf32>
    %181 = math.exp %180 : vector<2x32xf32>
    %cst_57 = arith.constant 1.000000e+00 : f32
    %182 = vector.broadcast %cst_57 : f32 to vector<2x32xf32>
    %183 = arith.addf %182, %181 : vector<2x32xf32>
    %184 = arith.divf %182, %183 : vector<2x32xf32>
    %185 = vector.extract_strided_slice %165 {offsets = [0, 64], sizes = [2, 32], strides = [1, 1]} : vector<2x96xf32> to vector<2x32xf32>
    %186 = vector.extract_strided_slice %168 {offsets = [0, 64], sizes = [2, 32], strides = [1, 1]} : vector<2x96xf32> to vector<2x32xf32>
    %187 = arith.mulf %176, %186 : vector<2x32xf32>
    %188 = arith.addf %185, %187 : vector<2x32xf32>
    %189 = math.tanh %188 : vector<2x32xf32>
    %cst_58 = arith.constant 1.000000e+00 : f32
    %190 = vector.broadcast %cst_58 : f32 to vector<2x32xf32>
    %191 = arith.subf %190, %184 : vector<2x32xf32>
    %192 = arith.mulf %191, %189 : vector<2x32xf32>
    %193 = arith.mulf %184, %158 : vector<2x32xf32>
    %194 = arith.addf %192, %193 : vector<2x32xf32>
    %195 = arith.index_cast %c4_i32 : i32 to index
    %c0_59 = arith.constant 0 : index
    %c0_60 = arith.constant 0 : index
    %196 = vector.load %arg13[%195, %c0_59, %c0_60] : memref<8x2x32xf32, #tpu.memory_space<vmem>>, vector<1x2x32xf32>
    %197 = vector.shape_cast %196 : vector<1x2x32xf32> to vector<2x32xf32>
    %198 = vector.shape_cast %194 : vector<2x32xf32> to vector<1x2x32xf32>
    tpu.vector_store %arg13[%195, %c0_59, %c0_60], %198 {strides = array<i32>} : memref<8x2x32xf32, #tpu.memory_space<vmem>>, vector<1x2x32xf32>,
    %c5_i32 = arith.constant 5 : i32
    %199 = arith.index_cast %c5_i32 : i32 to index
    %c0_61 = arith.constant 0 : index
    %c0_62 = arith.constant 0 : index
    %200 = vector.load %arg12[%199, %c0_61, %c0_62] : memref<8x2x96xf32, #tpu.memory_space<vmem>>, vector<1x2x96xf32>
    %201 = vector.shape_cast %200 : vector<1x2x96xf32> to vector<2x96xf32>
    %cst_63 = arith.constant dense<0.000000e+00> : vector<2x96xf32>
    %202 = tpu.matmul %194, %16, %cst_63 {dimension_numbers = #tpu.dot_dimension_numbers<[1], [0], [0], [1], [0, 0, 1, 1], [], []>} : vector<2x32xf32>, vector<32x96xf32>, vector<2x96xf32> -> vector<2x96xf32>
    %203 = vector.broadcast %17 : vector<1x96xf32> to vector<2x96xf32>
    %204 = arith.addf %202, %203 : vector<2x96xf32>
    %205 = vector.extract_strided_slice %201 {offsets = [0, 0], sizes = [2, 32], strides = [1, 1]} : vector<2x96xf32> to vector<2x32xf32>
    %206 = vector.extract_strided_slice %204 {offsets = [0, 0], sizes = [2, 32], strides = [1, 1]} : vector<2x96xf32> to vector<2x32xf32>
    %207 = arith.addf %205, %206 : vector<2x32xf32>
    %208 = arith.negf %207 : vector<2x32xf32>
    %209 = math.exp %208 : vector<2x32xf32>
    %cst_64 = arith.constant 1.000000e+00 : f32
    %210 = vector.broadcast %cst_64 : f32 to vector<2x32xf32>
    %211 = arith.addf %210, %209 : vector<2x32xf32>
    %212 = arith.divf %210, %211 : vector<2x32xf32>
    %213 = vector.extract_strided_slice %201 {offsets = [0, 32], sizes = [2, 32], strides = [1, 1]} : vector<2x96xf32> to vector<2x32xf32>
    %214 = vector.extract_strided_slice %204 {offsets = [0, 32], sizes = [2, 32], strides = [1, 1]} : vector<2x96xf32> to vector<2x32xf32>
    %215 = arith.addf %213, %214 : vector<2x32xf32>
    %216 = arith.negf %215 : vector<2x32xf32>
    %217 = math.exp %216 : vector<2x32xf32>
    %cst_65 = arith.constant 1.000000e+00 : f32
    %218 = vector.broadcast %cst_65 : f32 to vector<2x32xf32>
    %219 = arith.addf %218, %217 : vector<2x32xf32>
    %220 = arith.divf %218, %219 : vector<2x32xf32>
    %221 = vector.extract_strided_slice %201 {offsets = [0, 64], sizes = [2, 32], strides = [1, 1]} : vector<2x96xf32> to vector<2x32xf32>
    %222 = vector.extract_strided_slice %204 {offsets = [0, 64], sizes = [2, 32], strides = [1, 1]} : vector<2x96xf32> to vector<2x32xf32>
    %223 = arith.mulf %212, %222 : vector<2x32xf32>
    %224 = arith.addf %221, %223 : vector<2x32xf32>
    %225 = math.tanh %224 : vector<2x32xf32>
    %cst_66 = arith.constant 1.000000e+00 : f32
    %226 = vector.broadcast %cst_66 : f32 to vector<2x32xf32>
    %227 = arith.subf %226, %220 : vector<2x32xf32>
    %228 = arith.mulf %227, %225 : vector<2x32xf32>
    %229 = arith.mulf %220, %194 : vector<2x32xf32>
    %230 = arith.addf %228, %229 : vector<2x32xf32>
    %231 = arith.index_cast %c5_i32 : i32 to index
    %c0_67 = arith.constant 0 : index
    %c0_68 = arith.constant 0 : index
    %232 = vector.load %arg13[%231, %c0_67, %c0_68] : memref<8x2x32xf32, #tpu.memory_space<vmem>>, vector<1x2x32xf32>
    %233 = vector.shape_cast %232 : vector<1x2x32xf32> to vector<2x32xf32>
    %234 = vector.shape_cast %230 : vector<2x32xf32> to vector<1x2x32xf32>
    tpu.vector_store %arg13[%231, %c0_67, %c0_68], %234 {strides = array<i32>} : memref<8x2x32xf32, #tpu.memory_space<vmem>>, vector<1x2x32xf32>,
    %c6_i32 = arith.constant 6 : i32
    %235 = arith.index_cast %c6_i32 : i32 to index
    %c0_69 = arith.constant 0 : index
    %c0_70 = arith.constant 0 : index
    %236 = vector.load %arg12[%235, %c0_69, %c0_70] : memref<8x2x96xf32, #tpu.memory_space<vmem>>, vector<1x2x96xf32>
    %237 = vector.shape_cast %236 : vector<1x2x96xf32> to vector<2x96xf32>
    %cst_71 = arith.constant dense<0.000000e+00> : vector<2x96xf32>
    %238 = tpu.matmul %230, %16, %cst_71 {dimension_numbers = #tpu.dot_dimension_numbers<[1], [0], [0], [1], [0, 0, 1, 1], [], []>} : vector<2x32xf32>, vector<32x96xf32>, vector<2x96xf32> -> vector<2x96xf32>
    %239 = vector.broadcast %17 : vector<1x96xf32> to vector<2x96xf32>
    %240 = arith.addf %238, %239 : vector<2x96xf32>
    %241 = vector.extract_strided_slice %237 {offsets = [0, 0], sizes = [2, 32], strides = [1, 1]} : vector<2x96xf32> to vector<2x32xf32>
    %242 = vector.extract_strided_slice %240 {offsets = [0, 0], sizes = [2, 32], strides = [1, 1]} : vector<2x96xf32> to vector<2x32xf32>
    %243 = arith.addf %241, %242 : vector<2x32xf32>
    %244 = arith.negf %243 : vector<2x32xf32>
    %245 = math.exp %244 : vector<2x32xf32>
    %cst_72 = arith.constant 1.000000e+00 : f32
    %246 = vector.broadcast %cst_72 : f32 to vector<2x32xf32>
    %247 = arith.addf %246, %245 : vector<2x32xf32>
    %248 = arith.divf %246, %247 : vector<2x32xf32>
    %249 = vector.extract_strided_slice %237 {offsets = [0, 32], sizes = [2, 32], strides = [1, 1]} : vector<2x96xf32> to vector<2x32xf32>
    %250 = vector.extract_strided_slice %240 {offsets = [0, 32], sizes = [2, 32], strides = [1, 1]} : vector<2x96xf32> to vector<2x32xf32>
    %251 = arith.addf %249, %250 : vector<2x32xf32>
    %252 = arith.negf %251 : vector<2x32xf32>
    %253 = math.exp %252 : vector<2x32xf32>
    %cst_73 = arith.constant 1.000000e+00 : f32
    %254 = vector.broadcast %cst_73 : f32 to vector<2x32xf32>
    %255 = arith.addf %254, %253 : vector<2x32xf32>
    %256 = arith.divf %254, %255 : vector<2x32xf32>
    %257 = vector.extract_strided_slice %237 {offsets = [0, 64], sizes = [2, 32], strides = [1, 1]} : vector<2x96xf32> to vector<2x32xf32>
    %258 = vector.extract_strided_slice %240 {offsets = [0, 64], sizes = [2, 32], strides = [1, 1]} : vector<2x96xf32> to vector<2x32xf32>
    %259 = arith.mulf %248, %258 : vector<2x32xf32>
    %260 = arith.addf %257, %259 : vector<2x32xf32>
    %261 = math.tanh %260 : vector<2x32xf32>
    %cst_74 = arith.constant 1.000000e+00 : f32
    %262 = vector.broadcast %cst_74 : f32 to vector<2x32xf32>
    %263 = arith.subf %262, %256 : vector<2x32xf32>
    %264 = arith.mulf %263, %261 : vector<2x32xf32>
    %265 = arith.mulf %256, %230 : vector<2x32xf32>
    %266 = arith.addf %264, %265 : vector<2x32xf32>
    %267 = arith.index_cast %c6_i32 : i32 to index
    %c0_75 = arith.constant 0 : index
    %c0_76 = arith.constant 0 : index
    %268 = vector.load %arg13[%267, %c0_75, %c0_76] : memref<8x2x32xf32, #tpu.memory_space<vmem>>, vector<1x2x32xf32>
    %269 = vector.shape_cast %268 : vector<1x2x32xf32> to vector<2x32xf32>
    %270 = vector.shape_cast %266 : vector<2x32xf32> to vector<1x2x32xf32>
    tpu.vector_store %arg13[%267, %c0_75, %c0_76], %270 {strides = array<i32>} : memref<8x2x32xf32, #tpu.memory_space<vmem>>, vector<1x2x32xf32>,
    %c7_i32 = arith.constant 7 : i32
    %271 = arith.index_cast %c7_i32 : i32 to index
    %c0_77 = arith.constant 0 : index
    %c0_78 = arith.constant 0 : index
    %272 = vector.load %arg12[%271, %c0_77, %c0_78] : memref<8x2x96xf32, #tpu.memory_space<vmem>>, vector<1x2x96xf32>
    %273 = vector.shape_cast %272 : vector<1x2x96xf32> to vector<2x96xf32>
    %cst_79 = arith.constant dense<0.000000e+00> : vector<2x96xf32>
    %274 = tpu.matmul %266, %16, %cst_79 {dimension_numbers = #tpu.dot_dimension_numbers<[1], [0], [0], [1], [0, 0, 1, 1], [], []>} : vector<2x32xf32>, vector<32x96xf32>, vector<2x96xf32> -> vector<2x96xf32>
    %275 = vector.broadcast %17 : vector<1x96xf32> to vector<2x96xf32>
    %276 = arith.addf %274, %275 : vector<2x96xf32>
    %277 = vector.extract_strided_slice %273 {offsets = [0, 0], sizes = [2, 32], strides = [1, 1]} : vector<2x96xf32> to vector<2x32xf32>
    %278 = vector.extract_strided_slice %276 {offsets = [0, 0], sizes = [2, 32], strides = [1, 1]} : vector<2x96xf32> to vector<2x32xf32>
    %279 = arith.addf %277, %278 : vector<2x32xf32>
    %280 = arith.negf %279 : vector<2x32xf32>
    %281 = math.exp %280 : vector<2x32xf32>
    %cst_80 = arith.constant 1.000000e+00 : f32
    %282 = vector.broadcast %cst_80 : f32 to vector<2x32xf32>
    %283 = arith.addf %282, %281 : vector<2x32xf32>
    %284 = arith.divf %282, %283 : vector<2x32xf32>
    %285 = vector.extract_strided_slice %273 {offsets = [0, 32], sizes = [2, 32], strides = [1, 1]} : vector<2x96xf32> to vector<2x32xf32>
    %286 = vector.extract_strided_slice %276 {offsets = [0, 32], sizes = [2, 32], strides = [1, 1]} : vector<2x96xf32> to vector<2x32xf32>
    %287 = arith.addf %285, %286 : vector<2x32xf32>
    %288 = arith.negf %287 : vector<2x32xf32>
    %289 = math.exp %288 : vector<2x32xf32>
    %cst_81 = arith.constant 1.000000e+00 : f32
    %290 = vector.broadcast %cst_81 : f32 to vector<2x32xf32>
    %291 = arith.addf %290, %289 : vector<2x32xf32>
    %292 = arith.divf %290, %291 : vector<2x32xf32>
    %293 = vector.extract_strided_slice %273 {offsets = [0, 64], sizes = [2, 32], strides = [1, 1]} : vector<2x96xf32> to vector<2x32xf32>
    %294 = vector.extract_strided_slice %276 {offsets = [0, 64], sizes = [2, 32], strides = [1, 1]} : vector<2x96xf32> to vector<2x32xf32>
    %295 = arith.mulf %284, %294 : vector<2x32xf32>
    %296 = arith.addf %293, %295 : vector<2x32xf32>
    %297 = math.tanh %296 : vector<2x32xf32>
    %cst_82 = arith.constant 1.000000e+00 : f32
    %298 = vector.broadcast %cst_82 : f32 to vector<2x32xf32>
    %299 = arith.subf %298, %292 : vector<2x32xf32>
    %300 = arith.mulf %299, %297 : vector<2x32xf32>
    %301 = arith.mulf %292, %266 : vector<2x32xf32>
    %302 = arith.addf %300, %301 : vector<2x32xf32>
    %303 = arith.index_cast %c7_i32 : i32 to index
    %c0_83 = arith.constant 0 : index
    %c0_84 = arith.constant 0 : index
    %304 = vector.load %arg13[%303, %c0_83, %c0_84] : memref<8x2x32xf32, #tpu.memory_space<vmem>>, vector<1x2x32xf32>
    %305 = vector.shape_cast %304 : vector<1x2x32xf32> to vector<2x32xf32>
    %306 = vector.shape_cast %302 : vector<2x32xf32> to vector<1x2x32xf32>
    tpu.vector_store %arg13[%303, %c0_83, %c0_84], %306 {strides = array<i32>} : memref<8x2x32xf32, #tpu.memory_space<vmem>>, vector<1x2x32xf32>,
    %c8_i32 = arith.constant 8 : i32
    %c0_85 = arith.constant 0 : index
    %c0_86 = arith.constant 0 : index
    %c0_87 = arith.constant 0 : index
    %307 = vector.load %arg13[%c0_85, %c0_86, %c0_87] : memref<8x2x32xf32, #tpu.memory_space<vmem>>, vector<8x2x32xf32>
    %308 = vector.shape_cast %307 : vector<8x2x32xf32> to vector<16x32xf32>
    %c0_88 = arith.constant 0 : index
    %c0_89 = arith.constant 0 : index
    %309 = vector.load %arg8[%c0_88, %c0_89] : memref<32x8xf32, #tpu.memory_space<vmem>>, vector<32x8xf32>
    %cst_90 = arith.constant dense<0.000000e+00> : vector<16x8xf32>
    %310 = tpu.matmul %308, %309, %cst_90 {dimension_numbers = #tpu.dot_dimension_numbers<[1], [0], [0], [1], [0, 0, 1, 1], [], []>} : vector<16x32xf32>, vector<32x8xf32>, vector<16x8xf32> -> vector<16x8xf32>
    %c0_91 = arith.constant 0 : index
    %c0_92 = arith.constant 0 : index
    %311 = vector.load %arg9[%c0_91, %c0_92] : memref<1x8xf32, #tpu.memory_space<vmem>>, vector<1x8xf32>
    %312 = vector.broadcast %311 : vector<1x8xf32> to vector<16x8xf32>
    %313 = arith.addf %310, %312 : vector<16x8xf32>
    %314 = vector.shape_cast %313 : vector<16x8xf32> to vector<8x2x8xf32>
    %c0_93 = arith.constant 0 : index
    %c0_94 = arith.constant 0 : index
    %c0_95 = arith.constant 0 : index
    %315 = vector.load %arg10[%c0_93, %c0_94, %c0_95] : memref<8x2x8xf32, #tpu.memory_space<vmem>>, vector<8x2x8xf32>
    tpu.vector_store %arg10[%c0_93, %c0_94, %c0_95], %314 {strides = array<i32>} : memref<8x2x8xf32, #tpu.memory_space<vmem>>, vector<8x2x8xf32>,
    %c0_96 = arith.constant 0 : index
    %c0_97 = arith.constant 0 : index
    %316 = vector.load %arg11[%c0_96, %c0_97] : memref<2x32xf32, #tpu.memory_space<vmem>>, vector<2x32xf32>
    tpu.vector_store %arg11[%c0_96, %c0_97], %302 {strides = array<i32>} : memref<2x32xf32, #tpu.memory_space<vmem>>, vector<2x32xf32>,
    return
  }
}

</mosaic_0001>

<llo_original>
// kernel: mlp_drqn_rollout.1
$region0: #{mlp_drqn_rollout.1}
  #allocation0 [shape = 'u32[]', space=smem, size = 0x4, offset = 0x4, fixed_abs, tag = 'smem constant byte address 0x4 - core index']
  #allocation1 [shape = 'u32[144,128]{1,0:T(1,128)}', space=vmem, size = 0x12000, scoped, tag = 'internal scratch']
  #allocation2 [shape = 'f32[8,2,96]{2,1,0:T(2,128)}', space=vmem, size = 0x2000, scoped, tag = 'scratch operand']
  #allocation3 [shape = 'f32[8,2,32]{2,1,0:T(2,128)}', space=vmem, size = 0x2000, scoped, tag = 'scratch operand']
  %s0 = inlined_call_operand.vmem [shape: f32[8,2,16], index: 0, kind: input, shape index: {}]
  %s1 = inlined_call_operand.hbm [shape: f32[2,32], index: 1, kind: input, shape index: {}]
  %s2 = inlined_call_operand.hbm [shape: f32[16,32], index: 2, kind: input, shape index: {}]
  %s3 = inlined_call_operand.hbm [shape: f32[1,32], index: 3, kind: input, shape index: {}]
  %s4 = inlined_call_operand.vmem [shape: f32[32,96], index: 4, kind: input, shape index: {}]
  %s5 = inlined_call_operand.hbm [shape: f32[1,96], index: 5, kind: input, shape index: {}]
  %s6 = inlined_call_operand.hbm [shape: f32[32,96], index: 6, kind: input, shape index: {}]
  %s7 = inlined_call_operand.hbm [shape: f32[1,96], index: 7, kind: input, shape index: {}]
  %s8 = inlined_call_operand.vmem [shape: f32[32,8], index: 8, kind: input, shape index: {}]
  %s9 = inlined_call_operand.hbm [shape: f32[1,8], index: 9, kind: input, shape index: {}]
  %s10 = inlined_call_operand.hbm [shape: f32[8,2,8], index: 10, kind: output, shape index: {0}]
  %s11 = inlined_call_operand.hbm [shape: f32[2,32], index: 11, kind: output, shape index: {1}]
  %12 = xla_tuple %s10, %s11
  %s13 = sld [smem:[#allocation0]]
  $region86: #{mlp_drqn_rollout.1} parent=0
    _
  %s15 = ssub.s32 1, %s13
  %s16 = scalar_select 0, %s15, %s13
  $region1: #{mlp_drqn_rollout.1} parent=0
    #allocation4 [shape = 'u8[1024]{0}', space=vmem, size = 0x400, scoped, tag = 'input window, operand 1, single buffered']
    #allocation5 [shape = 's32[1]{0}', space=sflag, size = 0x4, scoped, tag = 'scoped memory for mlp_drqn_rollout.1']
    #allocation6 [shape = 's32[1]{0}', space=sflag, size = 0x4, scoped, tag = 'scoped memory for mlp_drqn_rollout.1']
    #allocation7 [shape = 'u8[8192]{0}', space=vmem, size = 0x2000, scoped, tag = 'input window, operand 2, single buffered']
    #allocation8 [shape = 's32[1]{0}', space=sflag, size = 0x4, scoped, tag = 'scoped memory for mlp_drqn_rollout.1']
    #allocation9 [shape = 'u8[512]{0}', space=vmem, size = 0x400, scoped, tag = 'input window, operand 3, single buffered']
    #allocation10 [shape = 'u8[512]{0}', space=vmem, size = 0x400, scoped, tag = 'input window, operand 5, single buffered']
    #allocation11 [shape = 's32[1]{0}', space=sflag, size = 0x4, scoped, tag = 'scoped memory for mlp_drqn_rollout.1']
    #allocation12 [shape = 'u8[16384]{0}', space=vmem, size = 0x4000, scoped, tag = 'input window, operand 6, single buffered']
    #allocation13 [shape = 'u8[512]{0}', space=vmem, size = 0x400, scoped, tag = 'input window, operand 7, single buffered']
    #allocation14 [shape = 's32[1]{0}', space=sflag, size = 0x4, scoped, tag = 'scoped memory for mlp_drqn_rollout.1']
    #allocation15 [shape = 'u8[512]{0}', space=vmem, size = 0x400, scoped, tag = 'input window, operand 9, single buffered']
    #allocation16 [shape = 'u8[8192]{0}', space=vmem, size = 0x2000, scoped, tag = 'output window, operand 0, single buffered']
    #allocation17 [shape = 'u8[1024]{0}', space=vmem, size = 0x400, scoped, tag = 'output window, operand 1, single buffered']
    #allocation18 [shape = 's32[1]{0}', space=sflag, size = 0x4, scoped, tag = 'scoped memory for mlp_drqn_rollout.1']
    %17 = vsyncpa [#allocation5], 0
    %18 = vsyncpa [#allocation8], 0
    %19 = vsyncpa [#allocation11], 0
    %20 = vsyncpa [#allocation14], 0
    %21 = vsyncpa [#allocation6], 0
    %22 = vsyncpa [#allocation18], 0
    // Predicated region
    $region2: #{mlp_drqn_rollout.1} parent=1 // pred_check
      _
    $region3: #{mlp_drqn_rollout.1} parent=1 // pred_check_branch
      %24 = sbr.rel (0) target = $region5
    $region4: #{mlp_drqn_rollout.1} parent=1 // pred_region
      _
    $region5: #{mlp_drqn_rollout.1} parent=1 // pred_fallthru
      _
    // Predicated region
    $region6: #{mlp_drqn_rollout.1} parent=1 // pred_check
      _
    $region7: #{mlp_drqn_rollout.1} parent=1 // pred_check_branch
      %26 = sbr.rel (0) target = $region9
    $region8: #{mlp_drqn_rollout.1} parent=1 // pred_region
      %s28 = ssub.s32 32, 32
      %29 = vsyncadd [#allocation5], %s28
      %s31 = sshll.u32 [#allocation4], 4
      %s32 = int_to_ptr.vmem [resolvable:$true] %s31
      %34 = dma.hbm_to_vmem [thread:$0]  %s1, 32, %s32, [#allocation5]
    $region9: #{mlp_drqn_rollout.1} parent=1 // pred_fallthru
      _
    // Predicated region
    $region10: #{mlp_drqn_rollout.1} parent=1 // pred_check
      _
    $region11: #{mlp_drqn_rollout.1} parent=1 // pred_check_branch
      %36 = sbr.rel (0) target = $region13
    $region12: #{mlp_drqn_rollout.1} parent=1 // pred_region
      %s38 = ssub.s32 256, 256
      %39 = vsyncadd [#allocation8], %s38
      %s40 = sshll.u32 [#allocation7], 4
      %s41 = int_to_ptr.vmem [resolvable:$true] %s40
      %46 = dma.hbm_to_vmem [thread:$0]  %s2, 256, %s41, [#allocation8], 128, 128, 8
    $region13: #{mlp_drqn_rollout.1} parent=1 // pred_fallthru
      _
    // Predicated region
    $region14: #{mlp_drqn_rollout.1} parent=1 // pred_check
      _
    $region15: #{mlp_drqn_rollout.1} parent=1 // pred_check_branch
      %48 = sbr.rel (0) target = $region17
    $region16: #{mlp_drqn_rollout.1} parent=1 // pred_region
      %s50 = ssub.s32 16, 16
      %51 = vsyncadd [#allocation8], %s50
      %s53 = sshll.u32 [#allocation9], 4
      %s54 = int_to_ptr.vmem [resolvable:$true] %s53
      %56 = dma.hbm_to_vmem [thread:$0]  %s3, 16, %s54, [#allocation8]
    $region17: #{mlp_drqn_rollout.1} parent=1 // pred_fallthru
      _
    // Predicated region
    $region18: #{mlp_drqn_rollout.1} parent=1 // pred_check
      _
    $region19: #{mlp_drqn_rollout.1} parent=1 // pred_check_branch
      %58 = sbr.rel (0) target = $region21
    $region20: #{mlp_drqn_rollout.1} parent=1 // pred_region
      _
    $region21: #{mlp_drqn_rollout.1} parent=1 // pred_fallthru
      _
    // Predicated region
    $region22: #{mlp_drqn_rollout.1} parent=1 // pred_check
      _
    $region23: #{mlp_drqn_rollout.1} parent=1 // pred_check_branch
      %60 = sbr.rel (0) target = $region25
    $region24: #{mlp_drqn_rollout.1} parent=1 // pred_region
      %s62 = ssub.s32 16, 16
      %63 = vsyncadd [#allocation11], %s62
      %s65 = sshll.u32 [#allocation10], 4
      %s66 = int_to_ptr.vmem [resolvable:$true] %s65
      %68 = dma.hbm_to_vmem [thread:$0]  %s5, 16, %s66, [#allocation11]
    $region25: #{mlp_drqn_rollout.1} parent=1 // pred_fallthru
      _
    // Predicated region
    $region26: #{mlp_drqn_rollout.1} parent=1 // pred_check
      _
    $region27: #{mlp_drqn_rollout.1} parent=1 // pred_check_branch
      %70 = sbr.rel (0) target = $region29
    $region28: #{mlp_drqn_rollout.1} parent=1 // pred_region
      %s72 = ssub.s32 512, 512
      %73 = vsyncadd [#allocation11], %s72
      %s74 = sshll.u32 [#allocation12], 4
      %s75 = int_to_ptr.vmem [resolvable:$true] %s74
      %80 = dma.hbm_to_vmem [thread:$0]  %s6, 512, %s75, [#allocation11], 128, 128, 8
    $region29: #{mlp_drqn_rollout.1} parent=1 // pred_fallthru
      _
    // Predicated region
    $region30: #{mlp_drqn_rollout.1} parent=1 // pred_check
      _
    $region31: #{mlp_drqn_rollout.1} parent=1 // pred_check_branch
      %82 = sbr.rel (0) target = $region33
    $region32: #{mlp_drqn_rollout.1} parent=1 // pred_region
      %s84 = ssub.s32 16, 16
      %85 = vsyncadd [#allocation14], %s84
      %s87 = sshll.u32 [#allocation13], 4
      %s88 = int_to_ptr.vmem [resolvable:$true] %s87
      %90 = dma.hbm_to_vmem [thread:$0]  %s7, 16, %s88, [#allocation14]
    $region33: #{mlp_drqn_rollout.1} parent=1 // pred_fallthru
      _
    // Predicated region
    $region34: #{mlp_drqn_rollout.1} parent=1 // pred_check
      _
    $region35: #{mlp_drqn_rollout.1} parent=1 // pred_check_branch
      %92 = sbr.rel (0) target = $region37
    $region36: #{mlp_drqn_rollout.1} parent=1 // pred_region
      _
    $region37: #{mlp_drqn_rollout.1} parent=1 // pred_fallthru
      _
    // Predicated region
    $region38: #{mlp_drqn_rollout.1} parent=1 // pred_check
      _
    $region39: #{mlp_drqn_rollout.1} parent=1 // pred_check_branch
      %94 = sbr.rel (0) target = $region41
    $region40: #{mlp_drqn_rollout.1} parent=1 // pred_region
      %s96 = ssub.s32 16, 16
      %97 = vsyncadd [#allocation14], %s96
      %s99 = sshll.u32 [#allocation15], 4
      %s100 = int_to_ptr.vmem [resolvable:$true] %s99
      %102 = dma.hbm_to_vmem [thread:$0]  %s9, 16, %s100, [#allocation14]
    $region41: #{mlp_drqn_rollout.1} parent=1 // pred_fallthru
      _
    // Predicated region
    $region42: #{mlp_drqn_rollout.1} parent=1 // pred_check
      _
    $region43: #{mlp_drqn_rollout.1} parent=1 // pred_check_branch
      %104 = sbr.rel (0) target = $region45
    $region44: #{mlp_drqn_rollout.1} parent=1 // pred_region
      %105 = dma.done [#allocation5], 32
    $region45: #{mlp_drqn_rollout.1} parent=1 // pred_fallthru
      _
    // Predicated region
    $region46: #{mlp_drqn_rollout.1} parent=1 // pred_check
      _
    $region47: #{mlp_drqn_rollout.1} parent=1 // pred_check_branch
      %107 = sbr.rel (0) target = $region49
    $region48: #{mlp_drqn_rollout.1} parent=1 // pred_region
      %108 = dma.done [#allocation8], 256
    $region49: #{mlp_drqn_rollout.1} parent=1 // pred_fallthru
      _
    // Predicated region
    $region50: #{mlp_drqn_rollout.1} parent=1 // pred_check
      _
    $region51: #{mlp_drqn_rollout.1} parent=1 // pred_check_branch
      %110 = sbr.rel (0) target = $region53
    $region52: #{mlp_drqn_rollout.1} parent=1 // pred_region
      %111 = dma.done [#allocation8], 16
    $region53: #{mlp_drqn_rollout.1} parent=1 // pred_fallthru
      _
    // Predicated region
    $region54: #{mlp_drqn_rollout.1} parent=1 // pred_check
      _
    $region55: #{mlp_drqn_rollout.1} parent=1 // pred_check_branch
      %113 = sbr.rel (0) target = $region57
    $region56: #{mlp_drqn_rollout.1} parent=1 // pred_region
      %114 = dma.done [#allocation11], 16
    $region57: #{mlp_drqn_rollout.1} parent=1 // pred_fallthru
      _
    // Predicated region
    $region58: #{mlp_drqn_rollout.1} parent=1 // pred_check
      _
    $region59: #{mlp_drqn_rollout.1} parent=1 // pred_check_branch
      %116 = sbr.rel (0) target = $region61
    $region60: #{mlp_drqn_rollout.1} parent=1 // pred_region
      %117 = dma.done [#allocation11], 512
    $region61: #{mlp_drqn_rollout.1} parent=1 // pred_fallthru
      _
    // Predicated region
    $region62: #{mlp_drqn_rollout.1} parent=1 // pred_check
      _
    $region63: #{mlp_drqn_rollout.1} parent=1 // pred_check_branch
      %119 = sbr.rel (0) target = $region65
    $region64: #{mlp_drqn_rollout.1} parent=1 // pred_region
      %120 = dma.done [#allocation14], 16
    $region65: #{mlp_drqn_rollout.1} parent=1 // pred_fallthru
      _
    // Predicated region
    $region66: #{mlp_drqn_rollout.1} parent=1 // pred_check
      _
    $region67: #{mlp_drqn_rollout.1} parent=1 // pred_check_branch
      %122 = sbr.rel (0) target = $region69
    $region68: #{mlp_drqn_rollout.1} parent=1 // pred_region
      %123 = dma.done [#allocation14], 16
    $region69: #{mlp_drqn_rollout.1} parent=1 // pred_fallthru
      _
    %v124 = vld [vmem:[%s0] sm:$0x3]
    %v125 = vld [vmem:[%s0 + $0x2] sm:$0x3]
    %v126 = vld [vmem:[%s0 + $0x4] sm:$0x3]
    %v127 = vld [vmem:[%s0 + $0x6] sm:$0x3]
    %v128 = vld [vmem:[%s0 + $0x8] sm:$0x3]
    %v129 = vld [vmem:[%s0 + $0xa] sm:$0x3]
    %v130 = vld [vmem:[%s0 + $0xc] sm:$0x3]
    %v131 = vld [vmem:[%s0 + $0xe] sm:$0x3]
    %v132 = vld [vmem:[#allocation7] sm:$0xff]
    %v133 = vld [vmem:[#allocation7 + $0x8] sm:$0xff]
    %v134 = vld [vmem:[#allocation9] sm:$0x1]
    %v136 = vlaneseq
    %v137 = vshrl.u32 %v136, 7
    %v138 = vsub.s32 0, %v137
    %v139 = vrot.slane %v134, %v138
    %v149 = vcombine.low %v124, %v125
    %v150 = vcombine.low %v126, %v127
    %v152 = vunpack.c.l.s4 1983009808
    %v153 = vunpack.c.0.s8 %v152
    %v154 = vlaneseq
    %v155 = vshrl.u32 %v154, 7
    %v156 = vsub.s32 %v153, %v155
    %v157 = vrot.slane %v149, %v156
    %v159 = vunpack.c.l.s4 1983009808
    %v160 = vunpack.c.0.s8 %v159
    %v161 = vlaneseq
    %v162 = vshrl.u32 %v161, 7
    %v163 = vsub.s32 %v160, %v162
    %v164 = vrot.slane %v150, %v163
    %v165 = vcombine.low %v157, %v164
    %v166 = vcombine.low %v128, %v129
    %v167 = vcombine.low %v130, %v131
    %v169 = vunpack.c.l.s4 1983009808
    %v170 = vunpack.c.0.s8 %v169
    %v171 = vlaneseq
    %v172 = vshrl.u32 %v171, 7
    %v173 = vsub.s32 %v170, %v172
    %v174 = vrot.slane %v166, %v173
    %v176 = vunpack.c.l.s4 1983009808
    %v177 = vunpack.c.0.s8 %v176
    %v178 = vlaneseq
    %v179 = vshrl.u32 %v178, 7
    %v180 = vsub.s32 %v177, %v179
    %v181 = vrot.slane %v167, %v180
    %v182 = vcombine.low %v174, %v181
    %vm183 = vcmask 130048
    %v184 = vsel %vm183, %v165, 0
    %v186 = vsel %vm183, %v182, 0
    %188 = vmatprep.subr.mxu0 0.0
    %189 = vmatpush1.msra.mxu0 0.0
    %190 = vmatprep.subr.mxu0 0.0
    %191 = vmatpush1.msra.mxu0 0.0
    %192 = vmatprep.subr.mxu0 0.0
    %193 = vmatpush1.msra.mxu0 0.0
    %194 = vmatprep.subr.mxu0 0.0
    %195 = vmatpush1.msra.mxu0 0.0
    %196 = vmatprep.subr.mxu0 0.0
    %197 = vmatpush1.msra.mxu0 0.0
    %198 = vmatprep.subr.mxu0 0.0
    %199 = vmatpush1.msra.mxu0 0.0
    %200 = vmatprep.subr.mxu0 0.0
    %201 = vmatpush1.msra.mxu0 0.0
    %202 = vmatprep.subr.mxu0 0.0
    %203 = vmatpush1.msra.mxu0 0.0
    %204 = vmatprep.subr.mxu0 0.0
    %205 = vmatpush1.msra.mxu0 0.0
    %206 = vmatprep.subr.mxu0 0.0
    %207 = vmatpush1.msra.mxu0 0.0
    %208 = vmatprep.subr.mxu0 0.0
    %209 = vmatpush1.msra.mxu0 0.0
    %210 = vmatprep.subr.mxu0 0.0
    %211 = vmatpush1.msra.mxu0 0.0
    %212 = vmatprep.subr.mxu0 0.0
    %213 = vmatpush1.msra.mxu0 0.0
    %214 = vmatprep.subr.mxu0 0.0
    %215 = vmatpush1.msra.mxu0 0.0
    %216 = vmatprep.subr.mxu0 0.0
    %217 = vmatpush1.msra.mxu0 %v133
    %218 = vmatprep.subr.mxu0 0.0
    %219 = vmatpush1.msra.mxu0 %v132
    %220 = vmatprep.subr.mxu0 0.0
    %221 = vmatpush2.msra.mxu0 0.0
    %222 = vmatprep.subr.mxu0 0.0
    %223 = vmatpush2.msra.mxu0 0.0
    %224 = vmatprep.subr.mxu0 0.0
    %225 = vmatpush2.msra.mxu0 0.0
    %226 = vmatprep.subr.mxu0 0.0
    %227 = vmatpush2.msra.mxu0 0.0
    %228 = vmatprep.subr.mxu0 0.0
    %229 = vmatpush2.msra.mxu0 0.0
    %230 = vmatprep.subr.mxu0 0.0
    %231 = vmatpush2.msra.mxu0 0.0
    %232 = vmatprep.subr.mxu0 0.0
    %233 = vmatpush2.msra.mxu0 0.0
    %234 = vmatprep.subr.mxu0 0.0
    %235 = vmatpush2.msra.mxu0 0.0
    %236 = vmatprep.subr.mxu0 0.0
    %237 = vmatpush2.msra.mxu0 0.0
    %238 = vmatprep.subr.mxu0 0.0
    %239 = vmatpush2.msra.mxu0 0.0
    %240 = vmatprep.subr.mxu0 0.0
    %241 = vmatpush2.msra.mxu0 0.0
    %242 = vmatprep.subr.mxu0 0.0
    %243 = vmatpush2.msra.mxu0 0.0
    %244 = vmatprep.subr.mxu0 0.0
    %245 = vmatpush2.msra.mxu0 0.0
    %246 = vmatprep.subr.mxu0 0.0
    %247 = vmatpush2.msra.mxu0 0.0
    %248 = vmatprep.subr.mxu0 0.0
    %249 = vmatpush2.msra.mxu0 0.0
    %250 = vmatprep.subr.mxu0 0.0
    %251 = vmatpush2.msra.mxu0 0.0
    %252 = vmatprep.mubr.f32.mxu0 0.0
    %253 = vmatmul.mubr.f32.gmra.mxu0 %v184
    %v254 = vpop.f32.mrf.mxu0
    %v255 = vadd.f32 %v139, %v254
    %v256 = vpop.f32.mrf.mxu0
    %257 = vmatprep.mubr.f32.mxu0 0.0
    %258 = vmatmul.mubr.f32.gmra.mxu0 %v186
    %v259 = vpop.f32.mrf.mxu0
    %v260 = vadd.f32 %v139, %v259
    %v261 = vpop.f32.mrf.mxu0
    %262 = vdwg.mxu0
    %v263 = vmax.f32 %v255, 0.0
    %v264 = vmax.f32 %v260, 0.0
    %v265 = vld [vmem:[%s4] sm:$0xff]
    %v266 = vld [vmem:[%s4 + $0x8] sm:$0xff]
    %v267 = vld [vmem:[%s4 + $0x10] sm:$0xff]
    %v268 = vld [vmem:[%s4 + $0x18] sm:$0xff]
    %v269 = vld [vmem:[#allocation10] sm:$0x1]
    %v271 = vlaneseq
    %v272 = vshrl.u32 %v271, 7
    %v273 = vsub.s32 0, %v272
    %v274 = vrot.slane %v269, %v273
    %vm276 = vcmask 261120
    %v278 = vsel %vm276, %v263, 0
    %v281 = vsel %vm276, %v264, 0
    %283 = vmatprep.subr.mxu0 0.0
    %284 = vmatpush1.msra.mxu0 0.0
    %285 = vmatprep.subr.mxu0 0.0
    %286 = vmatpush1.msra.mxu0 0.0
    %287 = vmatprep.subr.mxu0 0.0
    %288 = vmatpush1.msra.mxu0 0.0
    %289 = vmatprep.subr.mxu0 0.0
    %290 = vmatpush1.msra.mxu0 0.0
    %291 = vmatprep.subr.mxu0 0.0
    %292 = vmatpush1.msra.mxu0 0.0
    %293 = vmatprep.subr.mxu0 0.0
    %294 = vmatpush1.msra.mxu0 0.0
    %295 = vmatprep.subr.mxu0 0.0
    %296 = vmatpush1.msra.mxu0 0.0
    %297 = vmatprep.subr.mxu0 0.0
    %298 = vmatpush1.msra.mxu0 0.0
    %299 = vmatprep.subr.mxu0 0.0
    %300 = vmatpush1.msra.mxu0 0.0
    %301 = vmatprep.subr.mxu0 0.0
    %302 = vmatpush1.msra.mxu0 0.0
    %303 = vmatprep.subr.mxu0 0.0
    %304 = vmatpush1.msra.mxu0 0.0
    %305 = vmatprep.subr.mxu0 0.0
    %306 = vmatpush1.msra.mxu0 0.0
    %307 = vmatprep.subr.mxu0 0.0
    %308 = vmatpush1.msra.mxu0 %v268
    %309 = vmatprep.subr.mxu0 0.0
    %310 = vmatpush1.msra.mxu0 %v267
    %311 = vmatprep.subr.mxu0 0.0
    %312 = vmatpush1.msra.mxu0 %v266
    %313 = vmatprep.subr.mxu0 0.0
    %314 = vmatpush1.msra.mxu0 %v265
    %315 = vmatprep.subr.mxu0 0.0
    %316 = vmatpush2.msra.mxu0 0.0
    %317 = vmatprep.subr.mxu0 0.0
    %318 = vmatpush2.msra.mxu0 0.0
    %319 = vmatprep.subr.mxu0 0.0
    %320 = vmatpush2.msra.mxu0 0.0
    %321 = vmatprep.subr.mxu0 0.0
    %322 = vmatpush2.msra.mxu0 0.0
    %323 = vmatprep.subr.mxu0 0.0
    %324 = vmatpush2.msra.mxu0 0.0
    %325 = vmatprep.subr.mxu0 0.0
    %326 = vmatpush2.msra.mxu0 0.0
    %327 = vmatprep.subr.mxu0 0.0
    %328 = vmatpush2.msra.mxu0 0.0
    %329 = vmatprep.subr.mxu0 0.0
    %330 = vmatpush2.msra.mxu0 0.0
    %331 = vmatprep.subr.mxu0 0.0
    %332 = vmatpush2.msra.mxu0 0.0
    %333 = vmatprep.subr.mxu0 0.0
    %334 = vmatpush2.msra.mxu0 0.0
    %335 = vmatprep.subr.mxu0 0.0
    %336 = vmatpush2.msra.mxu0 0.0
    %337 = vmatprep.subr.mxu0 0.0
    %338 = vmatpush2.msra.mxu0 0.0
    %339 = vmatprep.subr.mxu0 0.0
    %340 = vmatpush2.msra.mxu0 0.0
    %341 = vmatprep.subr.mxu0 0.0
    %342 = vmatpush2.msra.mxu0 0.0
    %343 = vmatprep.subr.mxu0 0.0
    %344 = vmatpush2.msra.mxu0 0.0
    %345 = vmatprep.subr.mxu0 0.0
    %346 = vmatpush2.msra.mxu0 0.0
    %347 = vmatprep.mubr.f32.mxu0 0.0
    %348 = vmatmul.mubr.f32.gmra.mxu0 %v278
    %v349 = vpop.f32.mrf.mxu0
    %v350 = vadd.f32 %v274, %v349
    %v351 = vpop.f32.mrf.mxu0
    %352 = vmatprep.mubr.f32.mxu0 0.0
    %353 = vmatmul.mubr.f32.gmra.mxu0 %v281
    %v354 = vpop.f32.mrf.mxu0
    %v355 = vadd.f32 %v274, %v354
    %v356 = vpop.f32.mrf.mxu0
    %357 = vdwg.mxu0
    %v360 = vcombine.high %v350, %v350
    %v362 = vunpack.c.l.s4 1983009808
    %v363 = vunpack.c.0.s8 %v362
    %v364 = vlaneseq
    %v365 = vshrl.u32 %v364, 7
    %v366 = vsub.s32 %v363, %v365
    %v367 = vrot.slane %v350, %v366
    %v369 = vunpack.c.l.s4 1983009808
    %v370 = vunpack.c.0.s8 %v369
    %v371 = vlaneseq
    %v372 = vshrl.u32 %v371, 7
    %v373 = vsub.s32 %v370, %v372
    %v374 = vrot.slane %v360, %v373
    %v375 = vcombine.high %v367, %v367
    %v376 = vcombine.high %v374, %v374
    %v377 = vcombine.high %v355, %v355
    %v379 = vunpack.c.l.s4 1983009808
    %v380 = vunpack.c.0.s8 %v379
    %v381 = vlaneseq
    %v382 = vshrl.u32 %v381, 7
    %v383 = vsub.s32 %v380, %v382
    %v384 = vrot.slane %v355, %v383
    %v386 = vunpack.c.l.s4 1983009808
    %v387 = vunpack.c.0.s8 %v386
    %v388 = vlaneseq
    %v389 = vshrl.u32 %v388, 7
    %v390 = vsub.s32 %v387, %v389
    %v391 = vrot.slane %v377, %v390
    %v392 = vcombine.high %v384, %v384
    %v393 = vcombine.high %v391, %v391
    %vm402 = vcmask 779264
    %403 = vst.msk [vmem:[#allocation2] sm:$0x3] %vm402, %v367
    %404 = vst.msk [vmem:[#allocation2 + $0x2] sm:$0x3] %vm402, %v375
    %405 = vst.msk [vmem:[#allocation2 + $0x4] sm:$0x3] %vm402, %v374
    %406 = vst.msk [vmem:[#allocation2 + $0x6] sm:$0x3] %vm402, %v376
    %407 = vst.msk [vmem:[#allocation2 + $0x8] sm:$0x3] %vm402, %v384
    %408 = vst.msk [vmem:[#allocation2 + $0xa] sm:$0x3] %vm402, %v392
    %409 = vst.msk [vmem:[#allocation2 + $0xc] sm:$0x3] %vm402, %v391
    %410 = vst.msk [vmem:[#allocation2 + $0xe] sm:$0x3] %vm402, %v393
    %v411 = vld [vmem:[#allocation12] sm:$0xff]
    %v412 = vld [vmem:[#allocation12 + $0x8] sm:$0xff]
    %v413 = vld [vmem:[#allocation12 + $0x10] sm:$0xff]
    %v414 = vld [vmem:[#allocation12 + $0x18] sm:$0xff]
    %v415 = vld [vmem:[#allocation13] sm:$0x1]
    %v416 = vld [vmem:[#allocation4] sm:$0x3]
    %v417 = vld [vmem:[#allocation2] sm:$0x3]
    %v419 = vlaneseq
    %v420 = vshrl.u32 %v419, 7
    %v421 = vsub.s32 0, %v420
    %v422 = vrot.slane %v415, %v421
    %v425 = vsel %vm276, %v416, 0
    %427 = vmatprep.subr.mxu0 0.0
    %428 = vmatpush1.msra.mxu0 0.0
    %429 = vmatprep.subr.mxu0 0.0
    %430 = vmatpush1.msra.mxu0 0.0
    %431 = vmatprep.subr.mxu0 0.0
    %432 = vmatpush1.msra.mxu0 0.0
    %433 = vmatprep.subr.mxu0 0.0
    %434 = vmatpush1.msra.mxu0 0.0
    %435 = vmatprep.subr.mxu0 0.0
    %436 = vmatpush1.msra.mxu0 0.0
    %437 = vmatprep.subr.mxu0 0.0
    %438 = vmatpush1.msra.mxu0 0.0
    %439 = vmatprep.subr.mxu0 0.0
    %440 = vmatpush1.msra.mxu0 0.0
    %441 = vmatprep.subr.mxu0 0.0
    %442 = vmatpush1.msra.mxu0 0.0
    %443 = vmatprep.subr.mxu0 0.0
    %444 = vmatpush1.msra.mxu0 0.0
    %445 = vmatprep.subr.mxu0 0.0
    %446 = vmatpush1.msra.mxu0 0.0
    %447 = vmatprep.subr.mxu0 0.0
    %448 = vmatpush1.msra.mxu0 0.0
    %449 = vmatprep.subr.mxu0 0.0
    %450 = vmatpush1.msra.mxu0 0.0
    %451 = vmatprep.subr.mxu0 0.0
    %452 = vmatpush1.msra.mxu0 %v414
    %453 = vmatprep.subr.mxu0 0.0
    %454 = vmatpush1.msra.mxu0 %v413
    %455 = vmatprep.subr.mxu0 0.0
    %456 = vmatpush1.msra.mxu0 %v412
    %457 = vmatprep.subr.mxu0 0.0
    %458 = vmatpush1.msra.mxu0 %v411
    %459 = vmatprep.subr.mxu0 0.0
    %460 = vmatpush2.msra.mxu0 0.0
    %461 = vmatprep.subr.mxu0 0.0
    %462 = vmatpush2.msra.mxu0 0.0
    %463 = vmatprep.subr.mxu0 0.0
    %464 = vmatpush2.msra.mxu0 0.0
    %465 = vmatprep.subr.mxu0 0.0
    %466 = vmatpush2.msra.mxu0 0.0
    %467 = vmatprep.subr.mxu0 0.0
    %468 = vmatpush2.msra.mxu0 0.0
    %469 = vmatprep.subr.mxu0 0.0
    %470 = vmatpush2.msra.mxu0 0.0
    %471 = vmatprep.subr.mxu0 0.0
    %472 = vmatpush2.msra.mxu0 0.0
    %473 = vmatprep.subr.mxu0 0.0
    %474 = vmatpush2.msra.mxu0 0.0
    %475 = vmatprep.subr.mxu0 0.0
    %476 = vmatpush2.msra.mxu0 0.0
    %477 = vmatprep.subr.mxu0 0.0
    %478 = vmatpush2.msra.mxu0 0.0
    %479 = vmatprep.subr.mxu0 0.0
    %480 = vmatpush2.msra.mxu0 0.0
    %481 = vmatprep.subr.mxu0 0.0
    %482 = vmatpush2.msra.mxu0 0.0
    %483 = vmatprep.subr.mxu0 0.0
    %484 = vmatpush2.msra.mxu0 0.0
    %485 = vmatprep.subr.mxu0 0.0
    %486 = vmatpush2.msra.mxu0 0.0
    %487 = vmatprep.subr.mxu0 0.0
    %488 = vmatpush2.msra.mxu0 0.0
    %489 = vmatprep.subr.mxu0 0.0
    %490 = vmatpush2.msra.mxu0 0.0
    %491 = vmatprep.mubr.f32.mxu0 0.0
    %492 = vmatmul.mubr.f32.gmra.mxu0 %v425
    %v493 = vpop.f32.mrf.mxu0
    %v494 = vadd.f32 %v422, %v493
    %v495 = vpop.f32.mrf.mxu0
    %496 = vdwg.mxu0
    %v497 = vadd.f32 %v417, %v494
    %v498 = vxor.u32 %v497, 2147483648
    %v499 = vmul.f32 %v498, 1.442695
    %v500 = vpow.pop %v499
    %v501 = vadd.f32 %v500, 1.0
    %v502 = vrcp.pop %v501
    %v503 = vmul.f32 1.0, %v502
    %505 = vrot.lane.b32.xlu0 %v494, 64
    %v506 = vpop.permute.xlu0 %505
    %v508 = vmul.f32 %v503, %v506
    %510 = vrot.lane.b32.xlu0 %v508, 64
    %v511 = vpop.permute.xlu0 %510
    %v513 = vadd.f32 %v417, %v511
    %v514 = vtanh.pop %v513
    %v515 = vsub.f32 1.0, %v503
    %517 = vrot.lane.b32.xlu0 %v514, 96
    %v518 = vpop.permute.xlu0 %517
    %v520 = vmul.f32 %v515, %v518
    %521 = vrot.lane.b32.xlu0 %v416, 32
    %v522 = vpop.permute.xlu0 %521
    %v524 = vmul.f32 %v503, %v522
    %v525 = vadd.f32 %v520, %v524
    %527 = vrot.lane.b32.xlu0 %v525, 96
    %v528 = vpop.permute.xlu0 %527
    %vm530 = vcmask 254976
    %531 = vst.msk [vmem:[#allocation3] sm:$0x3] %vm530, %v528
    %s532 = scalar_lea.vmem [#allocation2], 2
    %v533 = vld [vmem:[%s532] sm:$0x3]
    %v534 = vsel %vm276, %v528, 0
    %536 = vmatprep.subr.mxu0 0.0
    %537 = vmatpush1.msra.mxu0 0.0
    %538 = vmatprep.subr.mxu0 0.0
    %539 = vmatpush1.msra.mxu0 0.0
    %540 = vmatprep.subr.mxu0 0.0
    %541 = vmatpush1.msra.mxu0 0.0
    %542 = vmatprep.subr.mxu0 0.0
    %543 = vmatpush1.msra.mxu0 0.0
    %544 = vmatprep.subr.mxu0 0.0
    %545 = vmatpush1.msra.mxu0 0.0
    %546 = vmatprep.subr.mxu0 0.0
    %547 = vmatpush1.msra.mxu0 0.0
    %548 = vmatprep.subr.mxu0 0.0
    %549 = vmatpush1.msra.mxu0 0.0
    %550 = vmatprep.subr.mxu0 0.0
    %551 = vmatpush1.msra.mxu0 0.0
    %552 = vmatprep.subr.mxu0 0.0
    %553 = vmatpush1.msra.mxu0 0.0
    %554 = vmatprep.subr.mxu0 0.0
    %555 = vmatpush1.msra.mxu0 0.0
    %556 = vmatprep.subr.mxu0 0.0
    %557 = vmatpush1.msra.mxu0 0.0
    %558 = vmatprep.subr.mxu0 0.0
    %559 = vmatpush1.msra.mxu0 0.0
    %560 = vmatprep.subr.mxu0 0.0
    %561 = vmatpush1.msra.mxu0 %v414
    %562 = vmatprep.subr.mxu0 0.0
    %563 = vmatpush1.msra.mxu0 %v413
    %564 = vmatprep.subr.mxu0 0.0
    %565 = vmatpush1.msra.mxu0 %v412
    %566 = vmatprep.subr.mxu0 0.0
    %567 = vmatpush1.msra.mxu0 %v411
    %568 = vmatprep.subr.mxu0 0.0
    %569 = vmatpush2.msra.mxu0 0.0
    %570 = vmatprep.subr.mxu0 0.0
    %571 = vmatpush2.msra.mxu0 0.0
    %572 = vmatprep.subr.mxu0 0.0
    %573 = vmatpush2.msra.mxu0 0.0
    %574 = vmatprep.subr.mxu0 0.0
    %575 = vmatpush2.msra.mxu0 0.0
    %576 = vmatprep.subr.mxu0 0.0
    %577 = vmatpush2.msra.mxu0 0.0
    %578 = vmatprep.subr.mxu0 0.0
    %579 = vmatpush2.msra.mxu0 0.0
    %580 = vmatprep.subr.mxu0 0.0
    %581 = vmatpush2.msra.mxu0 0.0
    %582 = vmatprep.subr.mxu0 0.0
    %583 = vmatpush2.msra.mxu0 0.0
    %584 = vmatprep.subr.mxu0 0.0
    %585 = vmatpush2.msra.mxu0 0.0
    %586 = vmatprep.subr.mxu0 0.0
    %587 = vmatpush2.msra.mxu0 0.0
    %588 = vmatprep.subr.mxu0 0.0
    %589 = vmatpush2.msra.mxu0 0.0
    %590 = vmatprep.subr.mxu0 0.0
    %591 = vmatpush2.msra.mxu0 0.0
    %592 = vmatprep.subr.mxu0 0.0
    %593 = vmatpush2.msra.mxu0 0.0
    %594 = vmatprep.subr.mxu0 0.0
    %595 = vmatpush2.msra.mxu0 0.0
    %596 = vmatprep.subr.mxu0 0.0
    %597 = vmatpush2.msra.mxu0 0.0
    %598 = vmatprep.subr.mxu0 0.0
    %599 = vmatpush2.msra.mxu0 0.0
    %600 = vmatprep.mubr.f32.mxu0 0.0
    %601 = vmatmul.mubr.f32.gmra.mxu0 %v534
    %v602 = vpop.f32.mrf.mxu0
    %v603 = vadd.f32 %v422, %v602
    %v604 = vpop.f32.mrf.mxu0
    %605 = vdwg.mxu0
    %v606 = vadd.f32 %v533, %v603
    %v607 = vxor.u32 %v606, 2147483648
    %v608 = vmul.f32 %v607, 1.442695
    %v609 = vpow.pop %v608
    %v610 = vadd.f32 %v609, 1.0
    %v611 = vrcp.pop %v610
    %v612 = vmul.f32 1.0, %v611
    %614 = vrot.lane.b32.xlu0 %v603, 64
    %v615 = vpop.permute.xlu0 %614
    %v617 = vmul.f32 %v612, %v615
    %619 = vrot.lane.b32.xlu0 %v617, 64
    %v620 = vpop.permute.xlu0 %619
    %v622 = vadd.f32 %v533, %v620
    %v623 = vtanh.pop %v622
    %v624 = vsub.f32 1.0, %v612
    %626 = vrot.lane.b32.xlu0 %v623, 96
    %v627 = vpop.permute.xlu0 %626
    %v629 = vmul.f32 %v624, %v627
    %v630 = vmul.f32 %v612, %v525
    %v631 = vadd.f32 %v629, %v630
    %633 = vrot.lane.b32.xlu0 %v631, 96
    %v634 = vpop.permute.xlu0 %633
    %s636 = scalar_lea.vmem [#allocation3], 2
    %637 = vst.msk [vmem:[%s636] sm:$0x3] %vm530, %v634
    %s638 = scalar_lea.vmem [#allocation2], 4
    %v639 = vld [vmem:[%s638] sm:$0x3]
    %v640 = vsel %vm276, %v634, 0
    %642 = vmatprep.subr.mxu0 0.0
    %643 = vmatpush1.msra.mxu0 0.0
    %644 = vmatprep.subr.mxu0 0.0
    %645 = vmatpush1.msra.mxu0 0.0
    %646 = vmatprep.subr.mxu0 0.0
    %647 = vmatpush1.msra.mxu0 0.0
    %648 = vmatprep.subr.mxu0 0.0
    %649 = vmatpush1.msra.mxu0 0.0
    %650 = vmatprep.subr.mxu0 0.0
    %651 = vmatpush1.msra.mxu0 0.0
    %652 = vmatprep.subr.mxu0 0.0
    %653 = vmatpush1.msra.mxu0 0.0
    %654 = vmatprep.subr.mxu0 0.0
    %655 = vmatpush1.msra.mxu0 0.0
    %656 = vmatprep.subr.mxu0 0.0
    %657 = vmatpush1.msra.mxu0 0.0
    %658 = vmatprep.subr.mxu0 0.0
    %659 = vmatpush1.msra.mxu0 0.0
    %660 = vmatprep.subr.mxu0 0.0
    %661 = vmatpush1.msra.mxu0 0.0
    %662 = vmatprep.subr.mxu0 0.0
    %663 = vmatpush1.msra.mxu0 0.0
    %664 = vmatprep.subr.mxu0 0.0
    %665 = vmatpush1.msra.mxu0 0.0
    %666 = vmatprep.subr.mxu0 0.0
    %667 = vmatpush1.msra.mxu0 %v414
    %668 = vmatprep.subr.mxu0 0.0
    %669 = vmatpush1.msra.mxu0 %v413
    %670 = vmatprep.subr.mxu0 0.0
    %671 = vmatpush1.msra.mxu0 %v412
    %672 = vmatprep.subr.mxu0 0.0
    %673 = vmatpush1.msra.mxu0 %v411
    %674 = vmatprep.subr.mxu0 0.0
    %675 = vmatpush2.msra.mxu0 0.0
    %676 = vmatprep.subr.mxu0 0.0
    %677 = vmatpush2.msra.mxu0 0.0
    %678 = vmatprep.subr.mxu0 0.0
    %679 = vmatpush2.msra.mxu0 0.0
    %680 = vmatprep.subr.mxu0 0.0
    %681 = vmatpush2.msra.mxu0 0.0
    %682 = vmatprep.subr.mxu0 0.0
    %683 = vmatpush2.msra.mxu0 0.0
    %684 = vmatprep.subr.mxu0 0.0
    %685 = vmatpush2.msra.mxu0 0.0
    %686 = vmatprep.subr.mxu0 0.0
    %687 = vmatpush2.msra.mxu0 0.0
    %688 = vmatprep.subr.mxu0 0.0
    %689 = vmatpush2.msra.mxu0 0.0
    %690 = vmatprep.subr.mxu0 0.0
    %691 = vmatpush2.msra.mxu0 0.0
    %692 = vmatprep.subr.mxu0 0.0
    %693 = vmatpush2.msra.mxu0 0.0
    %694 = vmatprep.subr.mxu0 0.0
    %695 = vmatpush2.msra.mxu0 0.0
    %696 = vmatprep.subr.mxu0 0.0
    %697 = vmatpush2.msra.mxu0 0.0
    %698 = vmatprep.subr.mxu0 0.0
    %699 = vmatpush2.msra.mxu0 0.0
    %700 = vmatprep.subr.mxu0 0.0
    %701 = vmatpush2.msra.mxu0 0.0
    %702 = vmatprep.subr.mxu0 0.0
    %703 = vmatpush2.msra.mxu0 0.0
    %704 = vmatprep.subr.mxu0 0.0
    %705 = vmatpush2.msra.mxu0 0.0
    %706 = vmatprep.mubr.f32.mxu0 0.0
    %707 = vmatmul.mubr.f32.gmra.mxu0 %v640
    %v708 = vpop.f32.mrf.mxu0
    %v709 = vadd.f32 %v422, %v708
    %v710 = vpop.f32.mrf.mxu0
    %711 = vdwg.mxu0
    %v712 = vadd.f32 %v639, %v709
    %v713 = vxor.u32 %v712, 2147483648
    %v714 = vmul.f32 %v713, 1.442695
    %v715 = vpow.pop %v714
    %v716 = vadd.f32 %v715, 1.0
    %v717 = vrcp.pop %v716
    %v718 = vmul.f32 1.0, %v717
    %720 = vrot.lane.b32.xlu0 %v709, 64
    %v721 = vpop.permute.xlu0 %720
    %v723 = vmul.f32 %v718, %v721
    %725 = vrot.lane.b32.xlu0 %v723, 64
    %v726 = vpop.permute.xlu0 %725
    %v728 = vadd.f32 %v639, %v726
    %v729 = vtanh.pop %v728
    %v730 = vsub.f32 1.0, %v718
    %732 = vrot.lane.b32.xlu0 %v729, 96
    %v733 = vpop.permute.xlu0 %732
    %v735 = vmul.f32 %v730, %v733
    %v736 = vmul.f32 %v718, %v631
    %v737 = vadd.f32 %v735, %v736
    %739 = vrot.lane.b32.xlu0 %v737, 96
    %v740 = vpop.permute.xlu0 %739
    %s742 = scalar_lea.vmem [#allocation3], 4
    %743 = vst.msk [vmem:[%s742] sm:$0x3] %vm530, %v740
    %s744 = scalar_lea.vmem [#allocation2], 6
    %v745 = vld [vmem:[%s744] sm:$0x3]
    %v746 = vsel %vm276, %v740, 0
    %748 = vmatprep.subr.mxu0 0.0
    %749 = vmatpush1.msra.mxu0 0.0
    %750 = vmatprep.subr.mxu0 0.0
    %751 = vmatpush1.msra.mxu0 0.0
    %752 = vmatprep.subr.mxu0 0.0
    %753 = vmatpush1.msra.mxu0 0.0
    %754 = vmatprep.subr.mxu0 0.0
    %755 = vmatpush1.msra.mxu0 0.0
    %756 = vmatprep.subr.mxu0 0.0
    %757 = vmatpush1.msra.mxu0 0.0
    %758 = vmatprep.subr.mxu0 0.0
    %759 = vmatpush1.msra.mxu0 0.0
    %760 = vmatprep.subr.mxu0 0.0
    %761 = vmatpush1.msra.mxu0 0.0
    %762 = vmatprep.subr.mxu0 0.0
    %763 = vmatpush1.msra.mxu0 0.0
    %764 = vmatprep.subr.mxu0 0.0
    %765 = vmatpush1.msra.mxu0 0.0
    %766 = vmatprep.subr.mxu0 0.0
    %767 = vmatpush1.msra.mxu0 0.0
    %768 = vmatprep.subr.mxu0 0.0
    %769 = vmatpush1.msra.mxu0 0.0
    %770 = vmatprep.subr.mxu0 0.0
    %771 = vmatpush1.msra.mxu0 0.0
    %772 = vmatprep.subr.mxu0 0.0
    %773 = vmatpush1.msra.mxu0 %v414
    %774 = vmatprep.subr.mxu0 0.0
    %775 = vmatpush1.msra.mxu0 %v413
    %776 = vmatprep.subr.mxu0 0.0
    %777 = vmatpush1.msra.mxu0 %v412
    %778 = vmatprep.subr.mxu0 0.0
    %779 = vmatpush1.msra.mxu0 %v411
    %780 = vmatprep.subr.mxu0 0.0
    %781 = vmatpush2.msra.mxu0 0.0
    %782 = vmatprep.subr.mxu0 0.0
    %783 = vmatpush2.msra.mxu0 0.0
    %784 = vmatprep.subr.mxu0 0.0
    %785 = vmatpush2.msra.mxu0 0.0
    %786 = vmatprep.subr.mxu0 0.0
    %787 = vmatpush2.msra.mxu0 0.0
    %788 = vmatprep.subr.mxu0 0.0
    %789 = vmatpush2.msra.mxu0 0.0
    %790 = vmatprep.subr.mxu0 0.0
    %791 = vmatpush2.msra.mxu0 0.0
    %792 = vmatprep.subr.mxu0 0.0
    %793 = vmatpush2.msra.mxu0 0.0
    %794 = vmatprep.subr.mxu0 0.0
    %795 = vmatpush2.msra.mxu0 0.0
    %796 = vmatprep.subr.mxu0 0.0
    %797 = vmatpush2.msra.mxu0 0.0
    %798 = vmatprep.subr.mxu0 0.0
    %799 = vmatpush2.msra.mxu0 0.0
    %800 = vmatprep.subr.mxu0 0.0
    %801 = vmatpush2.msra.mxu0 0.0
    %802 = vmatprep.subr.mxu0 0.0
    %803 = vmatpush2.msra.mxu0 0.0
    %804 = vmatprep.subr.mxu0 0.0
    %805 = vmatpush2.msra.mxu0 0.0
    %806 = vmatprep.subr.mxu0 0.0
    %807 = vmatpush2.msra.mxu0 0.0
    %808 = vmatprep.subr.mxu0 0.0
    %809 = vmatpush2.msra.mxu0 0.0
    %810 = vmatprep.subr.mxu0 0.0
    %811 = vmatpush2.msra.mxu0 0.0
    %812 = vmatprep.mubr.f32.mxu0 0.0
    %813 = vmatmul.mubr.f32.gmra.mxu0 %v746
    %v814 = vpop.f32.mrf.mxu0
    %v815 = vadd.f32 %v422, %v814
    %v816 = vpop.f32.mrf.mxu0
    %817 = vdwg.mxu0
    %v818 = vadd.f32 %v745, %v815
    %v819 = vxor.u32 %v818, 2147483648
    %v820 = vmul.f32 %v819, 1.442695
    %v821 = vpow.pop %v820
    %v822 = vadd.f32 %v821, 1.0
    %v823 = vrcp.pop %v822
    %v824 = vmul.f32 1.0, %v823
    %826 = vrot.lane.b32.xlu0 %v815, 64
    %v827 = vpop.permute.xlu0 %826
    %v829 = vmul.f32 %v824, %v827
    %831 = vrot.lane.b32.xlu0 %v829, 64
    %v832 = vpop.permute.xlu0 %831
    %v834 = vadd.f32 %v745, %v832
    %v835 = vtanh.pop %v834
    %v836 = vsub.f32 1.0, %v824
    %838 = vrot.lane.b32.xlu0 %v835, 96
    %v839 = vpop.permute.xlu0 %838
    %v841 = vmul.f32 %v836, %v839
    %v842 = vmul.f32 %v824, %v737
    %v843 = vadd.f32 %v841, %v842
    %845 = vrot.lane.b32.xlu0 %v843, 96
    %v846 = vpop.permute.xlu0 %845
    %s848 = scalar_lea.vmem [#allocation3], 6
    %849 = vst.msk [vmem:[%s848] sm:$0x3] %vm530, %v846
    %s850 = scalar_lea.vmem [#allocation2], 8
    %v851 = vld [vmem:[%s850] sm:$0x3]
    %v852 = vsel %vm276, %v846, 0
    %854 = vmatprep.subr.mxu0 0.0
    %855 = vmatpush1.msra.mxu0 0.0
    %856 = vmatprep.subr.mxu0 0.0
    %857 = vmatpush1.msra.mxu0 0.0
    %858 = vmatprep.subr.mxu0 0.0
    %859 = vmatpush1.msra.mxu0 0.0
    %860 = vmatprep.subr.mxu0 0.0
    %861 = vmatpush1.msra.mxu0 0.0
    %862 = vmatprep.subr.mxu0 0.0
    %863 = vmatpush1.msra.mxu0 0.0
    %864 = vmatprep.subr.mxu0 0.0
    %865 = vmatpush1.msra.mxu0 0.0
    %866 = vmatprep.subr.mxu0 0.0
    %867 = vmatpush1.msra.mxu0 0.0
    %868 = vmatprep.subr.mxu0 0.0
    %869 = vmatpush1.msra.mxu0 0.0
    %870 = vmatprep.subr.mxu0 0.0
    %871 = vmatpush1.msra.mxu0 0.0
    %872 = vmatprep.subr.mxu0 0.0
    %873 = vmatpush1.msra.mxu0 0.0
    %874 = vmatprep.subr.mxu0 0.0
    %875 = vmatpush1.msra.mxu0 0.0
    %876 = vmatprep.subr.mxu0 0.0
    %877 = vmatpush1.msra.mxu0 0.0
    %878 = vmatprep.subr.mxu0 0.0
    %879 = vmatpush1.msra.mxu0 %v414
    %880 = vmatprep.subr.mxu0 0.0
    %881 = vmatpush1.msra.mxu0 %v413
    %882 = vmatprep.subr.mxu0 0.0
    %883 = vmatpush1.msra.mxu0 %v412
    %884 = vmatprep.subr.mxu0 0.0
    %885 = vmatpush1.msra.mxu0 %v411
    %886 = vmatprep.subr.mxu0 0.0
    %887 = vmatpush2.msra.mxu0 0.0
    %888 = vmatprep.subr.mxu0 0.0
    %889 = vmatpush2.msra.mxu0 0.0
    %890 = vmatprep.subr.mxu0 0.0
    %891 = vmatpush2.msra.mxu0 0.0
    %892 = vmatprep.subr.mxu0 0.0
    %893 = vmatpush2.msra.mxu0 0.0
    %894 = vmatprep.subr.mxu0 0.0
    %895 = vmatpush2.msra.mxu0 0.0
    %896 = vmatprep.subr.mxu0 0.0
    %897 = vmatpush2.msra.mxu0 0.0
    %898 = vmatprep.subr.mxu0 0.0
    %899 = vmatpush2.msra.mxu0 0.0
    %900 = vmatprep.subr.mxu0 0.0
    %901 = vmatpush2.msra.mxu0 0.0
    %902 = vmatprep.subr.mxu0 0.0
    %903 = vmatpush2.msra.mxu0 0.0
    %904 = vmatprep.subr.mxu0 0.0
    %905 = vmatpush2.msra.mxu0 0.0
    %906 = vmatprep.subr.mxu0 0.0
    %907 = vmatpush2.msra.mxu0 0.0
    %908 = vmatprep.subr.mxu0 0.0
    %909 = vmatpush2.msra.mxu0 0.0
    %910 = vmatprep.subr.mxu0 0.0
    %911 = vmatpush2.msra.mxu0 0.0
    %912 = vmatprep.subr.mxu0 0.0
    %913 = vmatpush2.msra.mxu0 0.0
    %914 = vmatprep.subr.mxu0 0.0
    %915 = vmatpush2.msra.mxu0 0.0
    %916 = vmatprep.subr.mxu0 0.0
    %917 = vmatpush2.msra.mxu0 0.0
    %918 = vmatprep.mubr.f32.mxu0 0.0
    %919 = vmatmul.mubr.f32.gmra.mxu0 %v852
    %v920 = vpop.f32.mrf.mxu0
    %v921 = vadd.f32 %v422, %v920
    %v922 = vpop.f32.mrf.mxu0
    %923 = vdwg.mxu0
    %v924 = vadd.f32 %v851, %v921
    %v925 = vxor.u32 %v924, 2147483648
    %v926 = vmul.f32 %v925, 1.442695
    %v927 = vpow.pop %v926
    %v928 = vadd.f32 %v927, 1.0
    %v929 = vrcp.pop %v928
    %v930 = vmul.f32 1.0, %v929
    %932 = vrot.lane.b32.xlu0 %v921, 64
    %v933 = vpop.permute.xlu0 %932
    %v935 = vmul.f32 %v930, %v933
    %937 = vrot.lane.b32.xlu0 %v935, 64
    %v938 = vpop.permute.xlu0 %937
    %v940 = vadd.f32 %v851, %v938
    %v941 = vtanh.pop %v940
    %v942 = vsub.f32 1.0, %v930
    %944 = vrot.lane.b32.xlu0 %v941, 96
    %v945 = vpop.permute.xlu0 %944
    %v947 = vmul.f32 %v942, %v945
    %v948 = vmul.f32 %v930, %v843
    %v949 = vadd.f32 %v947, %v948
    %951 = vrot.lane.b32.xlu0 %v949, 96
    %v952 = vpop.permute.xlu0 %951
    %s954 = scalar_lea.vmem [#allocation3], 8
    %955 = vst.msk [vmem:[%s954] sm:$0x3] %vm530, %v952
    %s956 = scalar_lea.vmem [#allocation2], 10
    %v957 = vld [vmem:[%s956] sm:$0x3]
    %v958 = vsel %vm276, %v952, 0
    %960 = vmatprep.subr.mxu0 0.0
    %961 = vmatpush1.msra.mxu0 0.0
    %962 = vmatprep.subr.mxu0 0.0
    %963 = vmatpush1.msra.mxu0 0.0
    %964 = vmatprep.subr.mxu0 0.0
    %965 = vmatpush1.msra.mxu0 0.0
    %966 = vmatprep.subr.mxu0 0.0
    %967 = vmatpush1.msra.mxu0 0.0
    %968 = vmatprep.subr.mxu0 0.0
    %969 = vmatpush1.msra.mxu0 0.0
    %970 = vmatprep.subr.mxu0 0.0
    %971 = vmatpush1.msra.mxu0 0.0
    %972 = vmatprep.subr.mxu0 0.0
    %973 = vmatpush1.msra.mxu0 0.0
    %974 = vmatprep.subr.mxu0 0.0
    %975 = vmatpush1.msra.mxu0 0.0
    %976 = vmatprep.subr.mxu0 0.0
    %977 = vmatpush1.msra.mxu0 0.0
    %978 = vmatprep.subr.mxu0 0.0
    %979 = vmatpush1.msra.mxu0 0.0
    %980 = vmatprep.subr.mxu0 0.0
    %981 = vmatpush1.msra.mxu0 0.0
    %982 = vmatprep.subr.mxu0 0.0
    %983 = vmatpush1.msra.mxu0 0.0
    %984 = vmatprep.subr.mxu0 0.0
    %985 = vmatpush1.msra.mxu0 %v414
    %986 = vmatprep.subr.mxu0 0.0
    %987 = vmatpush1.msra.mxu0 %v413
    %988 = vmatprep.subr.mxu0 0.0
    %989 = vmatpush1.msra.mxu0 %v412
    %990 = vmatprep.subr.mxu0 0.0
    %991 = vmatpush1.msra.mxu0 %v411
    %992 = vmatprep.subr.mxu0 0.0
    %993 = vmatpush2.msra.mxu0 0.0
    %994 = vmatprep.subr.mxu0 0.0
    %995 = vmatpush2.msra.mxu0 0.0
    %996 = vmatprep.subr.mxu0 0.0
    %997 = vmatpush2.msra.mxu0 0.0
    %998 = vmatprep.subr.mxu0 0.0
    %999 = vmatpush2.msra.mxu0 0.0
    %1000 = vmatprep.subr.mxu0 0.0
    %1001 = vmatpush2.msra.mxu0 0.0
    %1002 = vmatprep.subr.mxu0 0.0
    %1003 = vmatpush2.msra.mxu0 0.0
    %1004 = vmatprep.subr.mxu0 0.0
    %1005 = vmatpush2.msra.mxu0 0.0
    %1006 = vmatprep.subr.mxu0 0.0
    %1007 = vmatpush2.msra.mxu0 0.0
    %1008 = vmatprep.subr.mxu0 0.0
    %1009 = vmatpush2.msra.mxu0 0.0
    %1010 = vmatprep.subr.mxu0 0.0
    %1011 = vmatpush2.msra.mxu0 0.0
    %1012 = vmatprep.subr.mxu0 0.0
    %1013 = vmatpush2.msra.mxu0 0.0
    %1014 = vmatprep.subr.mxu0 0.0
    %1015 = vmatpush2.msra.mxu0 0.0
    %1016 = vmatprep.subr.mxu0 0.0
    %1017 = vmatpush2.msra.mxu0 0.0
    %1018 = vmatprep.subr.mxu0 0.0
    %1019 = vmatpush2.msra.mxu0 0.0
    %1020 = vmatprep.subr.mxu0 0.0
    %1021 = vmatpush2.msra.mxu0 0.0
    %1022 = vmatprep.subr.mxu0 0.0
    %1023 = vmatpush2.msra.mxu0 0.0
    %1024 = vmatprep.mubr.f32.mxu0 0.0
    %1025 = vmatmul.mubr.f32.gmra.mxu0 %v958
    %v1026 = vpop.f32.mrf.mxu0
    %v1027 = vadd.f32 %v422, %v1026
    %v1028 = vpop.f32.mrf.mxu0
    %1029 = vdwg.mxu0
    %v1030 = vadd.f32 %v957, %v1027
    %v1031 = vxor.u32 %v1030, 2147483648
    %v1032 = vmul.f32 %v1031, 1.442695
    %v1033 = vpow.pop %v1032
    %v1034 = vadd.f32 %v1033, 1.0
    %v1035 = vrcp.pop %v1034
    %v1036 = vmul.f32 1.0, %v1035
    %1038 = vrot.lane.b32.xlu0 %v1027, 64
    %v1039 = vpop.permute.xlu0 %1038
    %v1041 = vmul.f32 %v1036, %v1039
    %1043 = vrot.lane.b32.xlu0 %v1041, 64
    %v1044 = vpop.permute.xlu0 %1043
    %v1046 = vadd.f32 %v957, %v1044
    %v1047 = vtanh.pop %v1046
    %v1048 = vsub.f32 1.0, %v1036
    %1050 = vrot.lane.b32.xlu0 %v1047, 96
    %v1051 = vpop.permute.xlu0 %1050
    %v1053 = vmul.f32 %v1048, %v1051
    %v1054 = vmul.f32 %v1036, %v949
    %v1055 = vadd.f32 %v1053, %v1054
    %1057 = vrot.lane.b32.xlu0 %v1055, 96
    %v1058 = vpop.permute.xlu0 %1057
    %s1060 = scalar_lea.vmem [#allocation3], 10
    %1061 = vst.msk [vmem:[%s1060] sm:$0x3] %vm530, %v1058
    %s1062 = scalar_lea.vmem [#allocation2], 12
    %v1063 = vld [vmem:[%s1062] sm:$0x3]
    %v1064 = vsel %vm276, %v1058, 0
    %1066 = vmatprep.subr.mxu0 0.0
    %1067 = vmatpush1.msra.mxu0 0.0
    %1068 = vmatprep.subr.mxu0 0.0
    %1069 = vmatpush1.msra.mxu0 0.0
    %1070 = vmatprep.subr.mxu0 0.0
    %1071 = vmatpush1.msra.mxu0 0.0
    %1072 = vmatprep.subr.mxu0 0.0
    %1073 = vmatpush1.msra.mxu0 0.0
    %1074 = vmatprep.subr.mxu0 0.0
    %1075 = vmatpush1.msra.mxu0 0.0
    %1076 = vmatprep.subr.mxu0 0.0
    %1077 = vmatpush1.msra.mxu0 0.0
    %1078 = vmatprep.subr.mxu0 0.0
    %1079 = vmatpush1.msra.mxu0 0.0
    %1080 = vmatprep.subr.mxu0 0.0
    %1081 = vmatpush1.msra.mxu0 0.0
    %1082 = vmatprep.subr.mxu0 0.0
    %1083 = vmatpush1.msra.mxu0 0.0
    %1084 = vmatprep.subr.mxu0 0.0
    %1085 = vmatpush1.msra.mxu0 0.0
    %1086 = vmatprep.subr.mxu0 0.0
    %1087 = vmatpush1.msra.mxu0 0.0
    %1088 = vmatprep.subr.mxu0 0.0
    %1089 = vmatpush1.msra.mxu0 0.0
    %1090 = vmatprep.subr.mxu0 0.0
    %1091 = vmatpush1.msra.mxu0 %v414
    %1092 = vmatprep.subr.mxu0 0.0
    %1093 = vmatpush1.msra.mxu0 %v413
    %1094 = vmatprep.subr.mxu0 0.0
    %1095 = vmatpush1.msra.mxu0 %v412
    %1096 = vmatprep.subr.mxu0 0.0
    %1097 = vmatpush1.msra.mxu0 %v411
    %1098 = vmatprep.subr.mxu0 0.0
    %1099 = vmatpush2.msra.mxu0 0.0
    %1100 = vmatprep.subr.mxu0 0.0
    %1101 = vmatpush2.msra.mxu0 0.0
    %1102 = vmatprep.subr.mxu0 0.0
    %1103 = vmatpush2.msra.mxu0 0.0
    %1104 = vmatprep.subr.mxu0 0.0
    %1105 = vmatpush2.msra.mxu0 0.0
    %1106 = vmatprep.subr.mxu0 0.0
    %1107 = vmatpush2.msra.mxu0 0.0
    %1108 = vmatprep.subr.mxu0 0.0
    %1109 = vmatpush2.msra.mxu0 0.0
    %1110 = vmatprep.subr.mxu0 0.0
    %1111 = vmatpush2.msra.mxu0 0.0
    %1112 = vmatprep.subr.mxu0 0.0
    %1113 = vmatpush2.msra.mxu0 0.0
    %1114 = vmatprep.subr.mxu0 0.0
    %1115 = vmatpush2.msra.mxu0 0.0
    %1116 = vmatprep.subr.mxu0 0.0
    %1117 = vmatpush2.msra.mxu0 0.0
    %1118 = vmatprep.subr.mxu0 0.0
    %1119 = vmatpush2.msra.mxu0 0.0
    %1120 = vmatprep.subr.mxu0 0.0
    %1121 = vmatpush2.msra.mxu0 0.0
    %1122 = vmatprep.subr.mxu0 0.0
    %1123 = vmatpush2.msra.mxu0 0.0
    %1124 = vmatprep.subr.mxu0 0.0
    %1125 = vmatpush2.msra.mxu0 0.0
    %1126 = vmatprep.subr.mxu0 0.0
    %1127 = vmatpush2.msra.mxu0 0.0
    %1128 = vmatprep.subr.mxu0 0.0
    %1129 = vmatpush2.msra.mxu0 0.0
    %1130 = vmatprep.mubr.f32.mxu0 0.0
    %1131 = vmatmul.mubr.f32.gmra.mxu0 %v1064
    %v1132 = vpop.f32.mrf.mxu0
    %v1133 = vadd.f32 %v422, %v1132
    %v1134 = vpop.f32.mrf.mxu0
    %1135 = vdwg.mxu0
    %v1136 = vadd.f32 %v1063, %v1133
    %v1137 = vxor.u32 %v1136, 2147483648
    %v1138 = vmul.f32 %v1137, 1.442695
    %v1139 = vpow.pop %v1138
    %v1140 = vadd.f32 %v1139, 1.0
    %v1141 = vrcp.pop %v1140
    %v1142 = vmul.f32 1.0, %v1141
    %1144 = vrot.lane.b32.xlu0 %v1133, 64
    %v1145 = vpop.permute.xlu0 %1144
    %v1147 = vmul.f32 %v1142, %v1145
    %1149 = vrot.lane.b32.xlu0 %v1147, 64
    %v1150 = vpop.permute.xlu0 %1149
    %v1152 = vadd.f32 %v1063, %v1150
    %v1153 = vtanh.pop %v1152
    %v1154 = vsub.f32 1.0, %v1142
    %1156 = vrot.lane.b32.xlu0 %v1153, 96
    %v1157 = vpop.permute.xlu0 %1156
    %v1159 = vmul.f32 %v1154, %v1157
    %v1160 = vmul.f32 %v1142, %v1055
    %v1161 = vadd.f32 %v1159, %v1160
    %1163 = vrot.lane.b32.xlu0 %v1161, 96
    %v1164 = vpop.permute.xlu0 %1163
    %s1166 = scalar_lea.vmem [#allocation3], 12
    %1167 = vst.msk [vmem:[%s1166] sm:$0x3] %vm530, %v1164
    %s1168 = scalar_lea.vmem [#allocation2], 14
    %v1169 = vld [vmem:[%s1168] sm:$0x3]
    %v1170 = vsel %vm276, %v1164, 0
    %1172 = vmatprep.subr.mxu0 0.0
    %1173 = vmatpush1.msra.mxu0 0.0
    %1174 = vmatprep.subr.mxu0 0.0
    %1175 = vmatpush1.msra.mxu0 0.0
    %1176 = vmatprep.subr.mxu0 0.0
    %1177 = vmatpush1.msra.mxu0 0.0
    %1178 = vmatprep.subr.mxu0 0.0
    %1179 = vmatpush1.msra.mxu0 0.0
    %1180 = vmatprep.subr.mxu0 0.0
    %1181 = vmatpush1.msra.mxu0 0.0
    %1182 = vmatprep.subr.mxu0 0.0
    %1183 = vmatpush1.msra.mxu0 0.0
    %1184 = vmatprep.subr.mxu0 0.0
    %1185 = vmatpush1.msra.mxu0 0.0
    %1186 = vmatprep.subr.mxu0 0.0
    %1187 = vmatpush1.msra.mxu0 0.0
    %1188 = vmatprep.subr.mxu0 0.0
    %1189 = vmatpush1.msra.mxu0 0.0
    %1190 = vmatprep.subr.mxu0 0.0
    %1191 = vmatpush1.msra.mxu0 0.0
    %1192 = vmatprep.subr.mxu0 0.0
    %1193 = vmatpush1.msra.mxu0 0.0
    %1194 = vmatprep.subr.mxu0 0.0
    %1195 = vmatpush1.msra.mxu0 0.0
    %1196 = vmatprep.subr.mxu0 0.0
    %1197 = vmatpush1.msra.mxu0 %v414
    %1198 = vmatprep.subr.mxu0 0.0
    %1199 = vmatpush1.msra.mxu0 %v413
    %1200 = vmatprep.subr.mxu0 0.0
    %1201 = vmatpush1.msra.mxu0 %v412
    %1202 = vmatprep.subr.mxu0 0.0
    %1203 = vmatpush1.msra.mxu0 %v411
    %1204 = vmatprep.subr.mxu0 0.0
    %1205 = vmatpush2.msra.mxu0 0.0
    %1206 = vmatprep.subr.mxu0 0.0
    %1207 = vmatpush2.msra.mxu0 0.0
    %1208 = vmatprep.subr.mxu0 0.0
    %1209 = vmatpush2.msra.mxu0 0.0
    %1210 = vmatprep.subr.mxu0 0.0
    %1211 = vmatpush2.msra.mxu0 0.0
    %1212 = vmatprep.subr.mxu0 0.0
    %1213 = vmatpush2.msra.mxu0 0.0
    %1214 = vmatprep.subr.mxu0 0.0
    %1215 = vmatpush2.msra.mxu0 0.0
    %1216 = vmatprep.subr.mxu0 0.0
    %1217 = vmatpush2.msra.mxu0 0.0
    %1218 = vmatprep.subr.mxu0 0.0
    %1219 = vmatpush2.msra.mxu0 0.0
    %1220 = vmatprep.subr.mxu0 0.0
    %1221 = vmatpush2.msra.mxu0 0.0
    %1222 = vmatprep.subr.mxu0 0.0
    %1223 = vmatpush2.msra.mxu0 0.0
    %1224 = vmatprep.subr.mxu0 0.0
    %1225 = vmatpush2.msra.mxu0 0.0
    %1226 = vmatprep.subr.mxu0 0.0
    %1227 = vmatpush2.msra.mxu0 0.0
    %1228 = vmatprep.subr.mxu0 0.0
    %1229 = vmatpush2.msra.mxu0 0.0
    %1230 = vmatprep.subr.mxu0 0.0
    %1231 = vmatpush2.msra.mxu0 0.0
    %1232 = vmatprep.subr.mxu0 0.0
    %1233 = vmatpush2.msra.mxu0 0.0
    %1234 = vmatprep.subr.mxu0 0.0
    %1235 = vmatpush2.msra.mxu0 0.0
    %1236 = vmatprep.mubr.f32.mxu0 0.0
    %1237 = vmatmul.mubr.f32.gmra.mxu0 %v1170
    %v1238 = vpop.f32.mrf.mxu0
    %v1239 = vadd.f32 %v422, %v1238
    %v1240 = vpop.f32.mrf.mxu0
    %1241 = vdwg.mxu0
    %v1242 = vadd.f32 %v1169, %v1239
    %v1243 = vxor.u32 %v1242, 2147483648
    %v1244 = vmul.f32 %v1243, 1.442695
    %v1245 = vpow.pop %v1244
    %v1246 = vadd.f32 %v1245, 1.0
    %v1247 = vrcp.pop %v1246
    %v1248 = vmul.f32 1.0, %v1247
    %1250 = vrot.lane.b32.xlu0 %v1239, 64
    %v1251 = vpop.permute.xlu0 %1250
    %v1253 = vmul.f32 %v1248, %v1251
    %1255 = vrot.lane.b32.xlu0 %v1253, 64
    %v1256 = vpop.permute.xlu0 %1255
    %v1258 = vadd.f32 %v1169, %v1256
    %v1259 = vtanh.pop %v1258
    %v1260 = vsub.f32 1.0, %v1248
    %1262 = vrot.lane.b32.xlu0 %v1259, 96
    %v1263 = vpop.permute.xlu0 %1262
    %v1265 = vmul.f32 %v1260, %v1263
    %v1266 = vmul.f32 %v1248, %v1161
    %v1267 = vadd.f32 %v1265, %v1266
    %1269 = vrot.lane.b32.xlu0 %v1267, 96
    %v1270 = vpop.permute.xlu0 %1269
    %s1272 = scalar_lea.vmem [#allocation3], 14
    %1273 = vst.msk [vmem:[%s1272] sm:$0x3] %vm530, %v1270
    %v1274 = vld [vmem:[#allocation3] sm:$0x3]
    %v1275 = vld [vmem:[#allocation3 + $0x2] sm:$0x3]
    %v1276 = vld [vmem:[#allocation3 + $0x4] sm:$0x3]
    %v1277 = vld [vmem:[#allocation3 + $0x6] sm:$0x3]
    %v1278 = vld [vmem:[#allocation3 + $0x8] sm:$0x3]
    %v1279 = vld [vmem:[#allocation3 + $0xa] sm:$0x3]
    %v1280 = vld [vmem:[#allocation3 + $0xc] sm:$0x3]
    %v1281 = vld [vmem:[#allocation3 + $0xe] sm:$0x3]
    %v1282 = vld [vmem:[%s8] sm:$0xff]
    %v1283 = vld [vmem:[%s8 + $0x8] sm:$0xff]
    %v1284 = vld [vmem:[%s8 + $0x10] sm:$0xff]
    %v1285 = vld [vmem:[%s8 + $0x18] sm:$0xff]
    %v1286 = vld [vmem:[#allocation15] sm:$0x1]
    %v1288 = vlaneseq
    %v1289 = vshrl.u32 %v1288, 7
    %v1290 = vsub.s32 0, %v1289
    %v1291 = vrot.slane %v1286, %v1290
    %v1301 = vcombine.low %v1274, %v1275
    %v1302 = vcombine.low %v1276, %v1277
    %v1304 = vunpack.c.l.s4 1983009808
    %v1305 = vunpack.c.0.s8 %v1304
    %v1306 = vlaneseq
    %v1307 = vshrl.u32 %v1306, 7
    %v1308 = vsub.s32 %v1305, %v1307
    %v1309 = vrot.slane %v1301, %v1308
    %v1311 = vunpack.c.l.s4 1983009808
    %v1312 = vunpack.c.0.s8 %v1311
    %v1313 = vlaneseq
    %v1314 = vshrl.u32 %v1313, 7
    %v1315 = vsub.s32 %v1312, %v1314
    %v1316 = vrot.slane %v1302, %v1315
    %v1317 = vcombine.low %v1309, %v1316
    %v1318 = vcombine.low %v1278, %v1279
    %v1319 = vcombine.low %v1280, %v1281
    %v1321 = vunpack.c.l.s4 1983009808
    %v1322 = vunpack.c.0.s8 %v1321
    %v1323 = vlaneseq
    %v1324 = vshrl.u32 %v1323, 7
    %v1325 = vsub.s32 %v1322, %v1324
    %v1326 = vrot.slane %v1318, %v1325
    %v1328 = vunpack.c.l.s4 1983009808
    %v1329 = vunpack.c.0.s8 %v1328
    %v1330 = vlaneseq
    %v1331 = vshrl.u32 %v1330, 7
    %v1332 = vsub.s32 %v1329, %v1331
    %v1333 = vrot.slane %v1319, %v1332
    %v1334 = vcombine.low %v1326, %v1333
    %v1335 = vsel %vm276, %v1317, 0
    %v1337 = vsel %vm276, %v1334, 0
    %1339 = vmatprep.subr.mxu0 0.0
    %1340 = vmatpush1.msra.mxu0 0.0
    %1341 = vmatprep.subr.mxu0 0.0
    %1342 = vmatpush1.msra.mxu0 0.0
    %1343 = vmatprep.subr.mxu0 0.0
    %1344 = vmatpush1.msra.mxu0 0.0
    %1345 = vmatprep.subr.mxu0 0.0
    %1346 = vmatpush1.msra.mxu0 0.0
    %1347 = vmatprep.subr.mxu0 0.0
    %1348 = vmatpush1.msra.mxu0 0.0
    %1349 = vmatprep.subr.mxu0 0.0
    %1350 = vmatpush1.msra.mxu0 0.0
    %1351 = vmatprep.subr.mxu0 0.0
    %1352 = vmatpush1.msra.mxu0 0.0
    %1353 = vmatprep.subr.mxu0 0.0
    %1354 = vmatpush1.msra.mxu0 0.0
    %1355 = vmatprep.subr.mxu0 0.0
    %1356 = vmatpush1.msra.mxu0 0.0
    %1357 = vmatprep.subr.mxu0 0.0
    %1358 = vmatpush1.msra.mxu0 0.0
    %1359 = vmatprep.subr.mxu0 0.0
    %1360 = vmatpush1.msra.mxu0 0.0
    %1361 = vmatprep.subr.mxu0 0.0
    %1362 = vmatpush1.msra.mxu0 0.0
    %1363 = vmatprep.subr.mxu0 0.0
    %1364 = vmatpush1.msra.mxu0 %v1285
    %1365 = vmatprep.subr.mxu0 0.0
    %1366 = vmatpush1.msra.mxu0 %v1284
    %1367 = vmatprep.subr.mxu0 0.0
    %1368 = vmatpush1.msra.mxu0 %v1283
    %1369 = vmatprep.subr.mxu0 0.0
    %1370 = vmatpush1.msra.mxu0 %v1282
    %1371 = vmatprep.subr.mxu0 0.0
    %1372 = vmatpush2.msra.mxu0 0.0
    %1373 = vmatprep.subr.mxu0 0.0
    %1374 = vmatpush2.msra.mxu0 0.0
    %1375 = vmatprep.subr.mxu0 0.0
    %1376 = vmatpush2.msra.mxu0 0.0
    %1377 = vmatprep.subr.mxu0 0.0
    %1378 = vmatpush2.msra.mxu0 0.0
    %1379 = vmatprep.subr.mxu0 0.0
    %1380 = vmatpush2.msra.mxu0 0.0
    %1381 = vmatprep.subr.mxu0 0.0
    %1382 = vmatpush2.msra.mxu0 0.0
    %1383 = vmatprep.subr.mxu0 0.0
    %1384 = vmatpush2.msra.mxu0 0.0
    %1385 = vmatprep.subr.mxu0 0.0
    %1386 = vmatpush2.msra.mxu0 0.0
    %1387 = vmatprep.subr.mxu0 0.0
    %1388 = vmatpush2.msra.mxu0 0.0
    %1389 = vmatprep.subr.mxu0 0.0
    %1390 = vmatpush2.msra.mxu0 0.0
    %1391 = vmatprep.subr.mxu0 0.0
    %1392 = vmatpush2.msra.mxu0 0.0
    %1393 = vmatprep.subr.mxu0 0.0
    %1394 = vmatpush2.msra.mxu0 0.0
    %1395 = vmatprep.subr.mxu0 0.0
    %1396 = vmatpush2.msra.mxu0 0.0
    %1397 = vmatprep.subr.mxu0 0.0
    %1398 = vmatpush2.msra.mxu0 0.0
    %1399 = vmatprep.subr.mxu0 0.0
    %1400 = vmatpush2.msra.mxu0 0.0
    %1401 = vmatprep.subr.mxu0 0.0
    %1402 = vmatpush2.msra.mxu0 0.0
    %1403 = vmatprep.mubr.f32.mxu0 0.0
    %1404 = vmatmul.mubr.f32.gmra.mxu0 %v1335
    %v1405 = vpop.f32.mrf.mxu0
    %v1406 = vadd.f32 %v1291, %v1405
    %v1407 = vpop.f32.mrf.mxu0
    %1408 = vmatprep.mubr.f32.mxu0 0.0
    %1409 = vmatmul.mubr.f32.gmra.mxu0 %v1337
    %v1410 = vpop.f32.mrf.mxu0
    %v1411 = vadd.f32 %v1291, %v1410
    %v1412 = vpop.f32.mrf.mxu0
    %1413 = vdwg.mxu0
    %v1416 = vcombine.high %v1406, %v1406
    %v1418 = vunpack.c.l.s4 1983009808
    %v1419 = vunpack.c.0.s8 %v1418
    %v1420 = vlaneseq
    %v1421 = vshrl.u32 %v1420, 7
    %v1422 = vsub.s32 %v1419, %v1421
    %v1423 = vrot.slane %v1406, %v1422
    %v1425 = vunpack.c.l.s4 1983009808
    %v1426 = vunpack.c.0.s8 %v1425
    %v1427 = vlaneseq
    %v1428 = vshrl.u32 %v1427, 7
    %v1429 = vsub.s32 %v1426, %v1428
    %v1430 = vrot.slane %v1416, %v1429
    %v1431 = vcombine.high %v1423, %v1423
    %v1432 = vcombine.high %v1430, %v1430
    %v1433 = vcombine.high %v1411, %v1411
    %v1435 = vunpack.c.l.s4 1983009808
    %v1436 = vunpack.c.0.s8 %v1435
    %v1437 = vlaneseq
    %v1438 = vshrl.u32 %v1437, 7
    %v1439 = vsub.s32 %v1436, %v1438
    %v1440 = vrot.slane %v1411, %v1439
    %v1442 = vunpack.c.l.s4 1983009808
    %v1443 = vunpack.c.0.s8 %v1442
    %v1444 = vlaneseq
    %v1445 = vshrl.u32 %v1444, 7
    %v1446 = vsub.s32 %v1443, %v1445
    %v1447 = vrot.slane %v1433, %v1446
    %v1448 = vcombine.high %v1440, %v1440
    %v1449 = vcombine.high %v1447, %v1447
    %vm1458 = vcmask 58368
    %1459 = vst.msk [vmem:[#allocation16] sm:$0x3] %vm1458, %v1423
    %1460 = vst.msk [vmem:[#allocation16 + $0x2] sm:$0x3] %vm1458, %v1431
    %1461 = vst.msk [vmem:[#allocation16 + $0x4] sm:$0x3] %vm1458, %v1430
    %1462 = vst.msk [vmem:[#allocation16 + $0x6] sm:$0x3] %vm1458, %v1432
    %1463 = vst.msk [vmem:[#allocation16 + $0x8] sm:$0x3] %vm1458, %v1440
    %1464 = vst.msk [vmem:[#allocation16 + $0xa] sm:$0x3] %vm1458, %v1448
    %1465 = vst.msk [vmem:[#allocation16 + $0xc] sm:$0x3] %vm1458, %v1447
    %1466 = vst.msk [vmem:[#allocation16 + $0xe] sm:$0x3] %vm1458, %v1449
    %1467 = vst.msk [vmem:[#allocation17] sm:$0x3] %vm530, %v1270
    // Predicated region
    $region70: #{mlp_drqn_rollout.1} parent=1 // pred_check
      _
    $region71: #{mlp_drqn_rollout.1} parent=1 // pred_check_branch
      %1469 = sbr.rel (0) target = $region73
    $region72: #{mlp_drqn_rollout.1} parent=1 // pred_region
      %s1471 = ssub.s32 256, 256
      %1472 = vsyncadd [#allocation6], %s1471
      %s1473 = sshll.u32 [#allocation16], 4
      %s1474 = int_to_ptr.vmem [resolvable:$true] %s1473
      %1479 = dma.vmem_to_hbm [thread:$0]  %s1474, 256, %s10, [#allocation6], 32, 32, 2
    $region73: #{mlp_drqn_rollout.1} parent=1 // pred_fallthru
      _
    // Predicated region
    $region74: #{mlp_drqn_rollout.1} parent=1 // pred_check
      _
    $region75: #{mlp_drqn_rollout.1} parent=1 // pred_check_branch
      %1481 = sbr.rel (0) target = $region77
    $region76: #{mlp_drqn_rollout.1} parent=1 // pred_region
      %s1483 = ssub.s32 32, 32
      %1484 = vsyncadd [#allocation18], %s1483
      %s1486 = sshll.u32 [#allocation17], 4
      %s1487 = int_to_ptr.vmem [resolvable:$true] %s1486
      %1489 = dma.vmem_to_hbm [thread:$0]  %s1487, 32, %s11, [#allocation18]
    $region77: #{mlp_drqn_rollout.1} parent=1 // pred_fallthru
      _
    // Predicated region
    $region78: #{mlp_drqn_rollout.1} parent=1 // pred_check
      _
    $region79: #{mlp_drqn_rollout.1} parent=1 // pred_check_branch
      %1491 = sbr.rel (0) target = $region81
    $region80: #{mlp_drqn_rollout.1} parent=1 // pred_region
      %1492 = dma.done [#allocation6], 256
    $region81: #{mlp_drqn_rollout.1} parent=1 // pred_fallthru
      _
    // Predicated region
    $region82: #{mlp_drqn_rollout.1} parent=1 // pred_check
      _
    $region83: #{mlp_drqn_rollout.1} parent=1 // pred_check_branch
      %1494 = sbr.rel (0) target = $region85
    $region84: #{mlp_drqn_rollout.1} parent=1 // pred_region
      %1495 = dma.done [#allocation18], 32
    $region85: #{mlp_drqn_rollout.1} parent=1 // pred_fallthru
      _
    %1496 = vsyncpa [#allocation5], 1
    %1497 = vsyncpa [#allocation8], 1
    %1498 = vsyncpa [#allocation11], 1
    %1499 = vsyncpa [#allocation14], 1
    %1500 = vsyncpa [#allocation6], 1
    %1501 = vsyncpa [#allocation18], 1

</llo_original>
